<compile_context>
chip_gen: v5e
topology: v5e:2x2
jax: 0.10.0
libtpu: 0.0.40
codegen_flags: <defaults>
</compile_context>

<pallas_src>
import functools
import math

import jax
import jax.numpy as jnp
from jax.experimental import pallas as pl
from jax.experimental.pallas import tpu as pltpu


# ----------------------------- helpers ---------------------------------------

def _layer_norm(x, w, b, eps=1e-5):
    # x: (S, D) f32; w, b: (1, D).  Biased variance, matching torch.nn.LayerNorm.
    mean = jnp.mean(x, axis=-1, keepdims=True)
    var = jnp.mean((x - mean) ** 2, axis=-1, keepdims=True)
    return (x - mean) * jax.lax.rsqrt(var + eps) * w + b


def _mm(x_f32, w_bf16):
    # PyTorch nn.Linear style: x (S, in) f32, w (out, in) bf16 -> (S, out) f32.
    # bf16 MXU inputs, f32 accumulation.
    return jax.lax.dot_general(
        x_f32.astype(jnp.bfloat16), w_bf16,
        (((1,), (1,)), ((), ())),
        preferred_element_type=jnp.float32)


# ------------------------ transformer encoder kernel -------------------------

def _encoder_kernel(nhead,
                    x_ref, mask_ref,
                    wqkv_ref, bqkv_ref, wo_ref, bo_ref,
                    w1_ref, b1_ref, w2_ref, b2_ref,
                    ln1w_ref, ln1b_ref, ln2w_ref, ln2b_ref,
                    out_ref, x_sc):
    """One grid step = one (batch element, encoder layer)."""
    layer = pl.program_id(1)
    num_layers = pl.num_programs(1)
    S, D = x_sc.shape
    hd = D // nhead
    scale = 1.0 / math.sqrt(hd)

    # Load the batch element's activations into the VMEM carry at layer 0.
    @pl.when(layer == 0)
    def _():
        x_sc[...] = x_ref[0].astype(jnp.float32)

    x = x_sc[...]                                       # (S, D) f32

    # Hoist the key-padding additive-mask broadcast out of the head loop.
    mask_b = jnp.broadcast_to(mask_ref[0], (S, S))      # (S_q, S_k), 0 / -1e9

    # ---- fused QKV projection: one (S,D)x(D,3D) MXU matmul ----
    qkv = _mm(x, wqkv_ref[0]) + bqkv_ref[0]             # (S, 3D) f32

    # ---- multi-head self-attention (per-head softmax, fused out-proj) ----
    heads = []
    for h in range(nhead):                              # small static head loop
        lo = h * hd
        qh = qkv[:, lo:lo + hd].astype(jnp.bfloat16)            # (S, hd)
        kh = qkv[:, D + lo:D + lo + hd].astype(jnp.bfloat16)    # (S, hd)
        vh = qkv[:, 2 * D + lo:2 * D + lo + hd].astype(jnp.bfloat16)

        s = jax.lax.dot_general(qh, kh, (((1,), (1,)), ((), ())),
                                preferred_element_type=jnp.float32)  # (S, S)
        s = s * scale + mask_b
        s = s - jnp.max(s, axis=-1, keepdims=True)
        p = jnp.exp(s)
        denom = jnp.sum(p, axis=-1, keepdims=True)
        p = p * pl.reciprocal(denom, approx=True)       # softmax (EUP recip)

        oh = jnp.dot(p.astype(jnp.bfloat16), vh,
                     preferred_element_type=jnp.float32)          # (S, hd)
        heads.append(oh)

    o = jnp.concatenate(heads, axis=-1)                 # (S, D)
    attn = _mm(o, wo_ref[0]) + bo_ref[0]                # fused out-proj
    x = _layer_norm(x + attn, ln1w_ref[0], ln1b_ref[0])

    # ---- feed-forward (relu), dim_feedforward == D ----
    hdn = jnp.maximum(_mm(x, w1_ref[0]) + b1_ref[0], 0.0)
    ff = _mm(hdn, w2_ref[0]) + b2_ref[0]
    y = _layer_norm(x + ff, ln2w_ref[0], ln2b_ref[0])

    # Carry to the next layer; write the lane-dense output on the last layer.
    x_sc[...] = y

    @pl.when(layer == num_layers - 1)
    def _():
        out_ref[0] = y.astype(out_ref.dtype)


def transformer_encoder(x, add_mask, params, nhead):
    """x: (B, S, D) f32, add_mask: (B, 1, S) f32 additive key mask."""
    B, S, D = x.shape
    L = params["wqkv"].shape[0]
    F = params["w1"].shape[1]

    kernel = functools.partial(_encoder_kernel, nhead)

    def act_map(b, l):   # activations / mask / output: follow batch index only
        return (b, 0, 0)

    def w_map(b, l):     # weights: stream one layer at a time
        return (l, 0, 0)

    grid_spec = pltpu.PrefetchScalarGridSpec(
        num_scalar_prefetch=0,
        grid=(B, L),
        in_specs=[
            pl.BlockSpec((1, S, D), act_map),            # x
            pl.BlockSpec((1, 1, S), act_map),            # additive key mask
            pl.BlockSpec((1, 3 * D, D), w_map),          # wqkv (bf16)
            pl.BlockSpec((1, 1, 3 * D), w_map),          # bqkv
            pl.BlockSpec((1, D, D), w_map),              # wo   (bf16)
            pl.BlockSpec((1, 1, D), w_map),              # bo
            pl.BlockSpec((1, F, D), w_map),              # w1   (bf16)
            pl.BlockSpec((1, 1, F), w_map),              # b1
            pl.BlockSpec((1, D, F), w_map),              # w2   (bf16)
            pl.BlockSpec((1, 1, D), w_map),              # b2
            pl.BlockSpec((1, 1, D), w_map),              # ln1w
            pl.BlockSpec((1, 1, D), w_map),              # ln1b
            pl.BlockSpec((1, 1, D), w_map),              # ln2w
            pl.BlockSpec((1, 1, D), w_map),              # ln2b
        ],
        out_specs=pl.BlockSpec((1, S, D), act_map),
        scratch_shapes=[pltpu.VMEM((S, D), jnp.float32)],
    )

    return pl.pallas_call(
        kernel,
        out_shape=jax.ShapeDtypeStruct((B, S, D), jnp.float32),
        grid_spec=grid_spec,
        compiler_params=pltpu.CompilerParams(
            dimension_semantics=("parallel", "arbitrary")),
    )(x, add_mask,
      params["wqkv"].astype(jnp.bfloat16), params["bqkv"],
      params["wo"].astype(jnp.bfloat16), params["bo"],
      params["w1"].astype(jnp.bfloat16), params["b1"],
      params["w2"].astype(jnp.bfloat16), params["b2"],
      params["ln1w"], params["ln1b"], params["ln2w"], params["ln2b"])


# ------------------------------ in_proj kernel --------------------------------

def _in_proj_kernel(x_ref, w_ref, b_ref, o_ref):
    y = jax.lax.dot_general(
        x_ref[...].astype(jnp.bfloat16), w_ref[...],
        (((1,), (1,)), ((), ())),
        preferred_element_type=jnp.float32)
    o_ref[...] = y + b_ref[...]


def in_proj(x, w, b):
    # x: (B, P, Cin), w: (D, Cin), b: (D,) -> (B, P, D) f32
    B, P, Cin = x.shape
    D = w.shape[0]
    x2 = x.reshape(B * P, Cin).astype(jnp.float32)
    vmem = pl.BlockSpec(memory_space=pltpu.MemorySpace.VMEM)
    out = pl.pallas_call(
        _in_proj_kernel,
        out_shape=jax.ShapeDtypeStruct((B * P, D), jnp.float32),
        in_specs=[vmem, vmem, vmem],
        out_specs=vmem,
    )(x2, w.astype(jnp.bfloat16), b.reshape(1, D).astype(jnp.float32))
    return out.reshape(B, P, D)


# ------------------------------- JAX glue -------------------------------------

def sinusoidal_pe(max_length, dim):
    # TODO(synk): AbsolutePositionalEncoding source not provided; standard
    # sinusoidal encoding (base 10000) is used.
    pos = jnp.arange(max_length, dtype=jnp.float32)[:, None]
    idx = jnp.arange(0, dim, 2, dtype=jnp.float32)
    div = jnp.exp(-jnp.log(10000.0) * idx / dim)
    pe = jnp.zeros((max_length, dim), jnp.float32)
    pe = pe.at[:, 0::2].set(jnp.sin(pos * div))
    pe = pe.at[:, 1::2].set(jnp.cos(pos * div))
    return pe


def forward(params, audio, length, nhead, frames_per_patch):
    """AudioTransformerBackbone.forward.

    audio: (B, in_channels, T) float32   (batch_first=True, channels_last=False)
    length: (B,) int32 frame lengths (or None)
    Returns: (B, num_patches + 1, embedding_dim) float32
    """
    B, C, T = audio.shape
    pad = T % frames_per_patch
    T_trim = T - pad
    P = T_trim // frames_per_patch
    D = params["in_w"].shape[0]

    if length is None:
        length = jnp.full((B,), T, dtype=jnp.int32)

    # frame-level padding mask and its patch-level downsample
    frame_pad = jnp.arange(T_trim)[None, :] >= length[:, None]                # (B, T_trim)
    patch_pad = frame_pad.reshape(B, P, frames_per_patch).sum(axis=-1) > 0    # (B, P)
    patch_length = jnp.sum(jnp.logical_not(patch_pad), axis=-1)               # (B,)

    # unfold to patches, matching torch's F.unfold + view/permute ordering
    x = audio[:, :, :T_trim]                                # (B, C, T_trim)
    x = x.reshape(B, C, P, frames_per_patch)                # (B, C, P, fpp)
    x = jnp.transpose(x, (0, 2, 3, 1))                      # (B, P, fpp, C)
    x = x.reshape(B, P, frames_per_patch * C)               # feature = f*C + c

    # in_proj Linear (Pallas)
    x = in_proj(x, params["in_w"], params["in_b"])          # (B, P, D) f32

    # transformer_forward preamble
    pad_mask = jnp.arange(P)[None, :] >= patch_length[:, None]                # (B, P)
    x = jnp.where(pad_mask[..., None], 0.0, x)
    x = x + sinusoidal_pe(P, D)[None]
    x = jnp.where(pad_mask[..., None], 0.0, x)

    cls = jnp.broadcast_to(params["cls"].reshape(1, 1, D), (B, 1, D))
    x = jnp.concatenate([cls.astype(jnp.float32), x], axis=1)                 # (B, P+1, D)

    pad_full = jnp.concatenate([jnp.zeros((B, 1), bool), pad_mask], axis=1)   # (B, P+1)
    # -1e9 (finite in bf16/f32) instead of -inf: safe under mixed precision
    add_mask = jnp.where(pad_full, -1e9, 0.0).astype(jnp.float32)[:, None, :]

    # nn.TransformerEncoder stack (Pallas, dropout = identity / eval mode)
    return transformer_encoder(x, add_mask, params, nhead)


def init_params(key, in_channels, embedding_dim, frames_per_patch, num_layers):
    ks = jax.random.split(key, 12)

    def nrm(k, shape, scale=1.0):
        return (scale * jax.random.normal(k, shape)).astype(jnp.float32)

    D = embedding_dim
    Cin = frames_per_patch * in_channels
    inv = 1.0 / math.sqrt(D)
    return {
        "in_w": nrm(ks[0], (D, Cin), 1.0 / math.sqrt(Cin)),
        "in_b": nrm(ks[1], (D,), 0.01),
        "cls": nrm(ks[2], (D,)),                                   # ~ normal_()
        "wqkv": nrm(ks[3], (num_layers, 3 * D, D), inv),
        "bqkv": nrm(ks[4], (num_layers, 1, 3 * D), 0.01),
        "wo": nrm(ks[5], (num_layers, D, D), inv),
        "bo": nrm(ks[6], (num_layers, 1, D), 0.01),
        "w1": nrm(ks[7], (num_layers, D, D), inv),                 # dim_ff = D
        "b1": nrm(ks[8], (num_layers, 1, D), 0.01),
        "w2": nrm(ks[9], (num_layers, D, D), inv),
        "b2": jnp.zeros((num_layers, 1, D), jnp.float32),
        "ln1w": jnp.ones((num_layers, 1, D), jnp.float32),
        "ln1b": jnp.zeros((num_layers, 1, D), jnp.float32),
        "ln2w": jnp.ones((num_layers, 1, D), jnp.float32),
        "ln2b": jnp.zeros((num_layers, 1, D), jnp.float32),
    }


if __name__ == "__main__":
    IN_CHANNELS = 16
    EMBED_DIM = 128          # multiple of 128 -> lane-dense activations/output
    FRAMES_PER_PATCH = 4
    NHEAD = 4
    NUM_LAYERS = 2
    BATCH = 2
    TIME = 34                # 34 % 4 = 2 -> exercises the trim path; P = 8

    key = jax.random.PRNGKey(0)
    k_audio, k_param = jax.random.split(key, 2)

    audio = jax.random.normal(k_audio, (BATCH, IN_CHANNELS, TIME),
                              dtype=jnp.float32)
    length = jnp.array([TIME, 20], dtype=jnp.int32)
    params = init_params(k_param, IN_CHANNELS, EMBED_DIM, FRAMES_PER_PATCH,
                         NUM_LAYERS)

    fwd = jax.jit(functools.partial(forward, nhead=NHEAD,
                                    frames_per_patch=FRAMES_PER_PATCH))
    out = fwd(params, audio, length)
    jax.block_until_ready(out)

    P = (TIME - TIME % FRAMES_PER_PATCH) // FRAMES_PER_PATCH
    assert out.shape == (BATCH, P + 1, EMBED_DIM)
    assert out.dtype == jnp.float32
    assert bool(jnp.all(jnp.isfinite(out)))
    print("KERNEL_OK")
</pallas_src>

<mosaic_0001>
module attributes {stable_mosaic.version = 11 : i64} {
  func.func @_in_proj_kernel(%arg0: memref<16x64xf32, #tpu.memory_space<vmem>>, %arg1: memref<128x64xbf16, #tpu.memory_space<vmem>>, %arg2: memref<1x128xf32, #tpu.memory_space<vmem>>, %arg3: memref<16x128xf32, #tpu.memory_space<vmem>>) attributes {dimension_semantics = [], scalar_prefetch = 0 : i64, scratch_operands = 0 : i64, tpu.core_type = #tpu.core_type<tc>} {
    %c0 = arith.constant 0 : index
    %c0_0 = arith.constant 0 : index
    %0 = vector.load %arg0[%c0, %c0_0] : memref<16x64xf32, #tpu.memory_space<vmem>>, vector<16x64xf32>
    %1 = arith.truncf %0 : vector<16x64xf32> to vector<16x64xbf16>
    %c0_1 = arith.constant 0 : index
    %c0_2 = arith.constant 0 : index
    %2 = vector.load %arg1[%c0_1, %c0_2] : memref<128x64xbf16, #tpu.memory_space<vmem>>, vector<128x64xbf16>
    %cst = arith.constant dense<0.000000e+00> : vector<16x128xf32>
    %3 = tpu.matmul %1, %2, %cst {dimension_numbers = #tpu.dot_dimension_numbers<[1], [1], [0], [0], [0, 0, 1, 0], [], []>} : vector<16x64xbf16>, vector<128x64xbf16>, vector<16x128xf32> -> vector<16x128xf32>
    %c0_3 = arith.constant 0 : index
    %c0_4 = arith.constant 0 : index
    %4 = vector.load %arg2[%c0_3, %c0_4] : memref<1x128xf32, #tpu.memory_space<vmem>>, vector<1x128xf32>
    %5 = vector.broadcast %4 : vector<1x128xf32> to vector<16x128xf32>
    %6 = arith.addf %3, %5 : vector<16x128xf32>
    %c0_5 = arith.constant 0 : index
    %c0_6 = arith.constant 0 : index
    %7 = vector.load %arg3[%c0_5, %c0_6] : memref<16x128xf32, #tpu.memory_space<vmem>>, vector<16x128xf32>
    tpu.vector_store %arg3[%c0_5, %c0_6], %6 {strides = array<i32>} : memref<16x128xf32, #tpu.memory_space<vmem>>, vector<16x128xf32>,
    return
  }
}

module attributes {stable_mosaic.version = 11 : i64} {
  func.func @_encoder_kernel(%arg0: i32, %arg1: i32, %arg2: memref<1x9x128xf32, #tpu.memory_space<vmem>>, %arg3: memref<1x1x9xf32, #tpu.memory_space<vmem>>, %arg4: memref<1x384x128xbf16, #tpu.memory_space<vmem>>, %arg5: memref<1x1x384xf32, #tpu.memory_space<vmem>>, %arg6: memref<1x128x128xbf16, #tpu.memory_space<vmem>>, %arg7: memref<1x1x128xf32, #tpu.memory_space<vmem>>, %arg8: memref<1x128x128xbf16, #tpu.memory_space<vmem>>, %arg9: memref<1x1x128xf32, #tpu.memory_space<vmem>>, %arg10: memref<1x128x128xbf16, #tpu.memory_space<vmem>>, %arg11: memref<1x1x128xf32, #tpu.memory_space<vmem>>, %arg12: memref<1x1x128xf32, #tpu.memory_space<vmem>>, %arg13: memref<1x1x128xf32, #tpu.memory_space<vmem>>, %arg14: memref<1x1x128xf32, #tpu.memory_space<vmem>>, %arg15: memref<1x1x128xf32, #tpu.memory_space<vmem>>, %arg16: memref<1x9x128xf32, #tpu.memory_space<vmem>>, %arg17: memref<9x128xf32, #tpu.memory_space<vmem>>) attributes {dimension_semantics = [#tpu.dimension_semantics<parallel>, #tpu.dimension_semantics<arbitrary>], iteration_bounds = array<i64: 2, 2>, scalar_prefetch = 0 : i64, scratch_operands = 1 : i64, tpu.core_type = #tpu.core_type<tc>, window_params = [{transform_indices = @transform_0, window_bounds = array<i64: 1, 9, 128>}, {transform_indices = @transform_1, window_bounds = array<i64: 1, 1, 9>}, {transform_indices = @transform_2, window_bounds = array<i64: 1, 384, 128>}, {transform_indices = @transform_3, window_bounds = array<i64: 1, 1, 384>}, {transform_indices = @transform_4, window_bounds = array<i64: 1, 128, 128>}, {transform_indices = @transform_5, window_bounds = array<i64: 1, 1, 128>}, {transform_indices = @transform_6, window_bounds = array<i64: 1, 128, 128>}, {transform_indices = @transform_7, window_bounds = array<i64: 1, 1, 128>}, {transform_indices = @transform_8, window_bounds = array<i64: 1, 128, 128>}, {transform_indices = @transform_9, window_bounds = array<i64: 1, 1, 128>}, {transform_indices = @transform_10, window_bounds = array<i64: 1, 1, 128>}, {transform_indices = @transform_11, window_bounds = array<i64: 1, 1, 128>}, {transform_indices = @transform_12, window_bounds = array<i64: 1, 1, 128>}, {transform_indices = @transform_13, window_bounds = array<i64: 1, 1, 128>}, {transform_indices = @transform_14, window_bounds = array<i64: 1, 9, 128>}]} {
    %c0_i32 = arith.constant 0 : i32
    %0 = arith.cmpi eq, %arg1, %c0_i32 : i32
    %1 = arith.extui %0 : i1 to i32
    %c0_i32_0 = arith.constant 0 : i32
    %2 = arith.cmpi ne, %1, %c0_i32_0 : i32
    scf.if %2 {
      %c0_78 = arith.constant 0 : index
      %c0_79 = arith.constant 0 : index
      %c0_80 = arith.constant 0 : index
      %189 = vector.load %arg2[%c0_78, %c0_79, %c0_80] : memref<1x9x128xf32, #tpu.memory_space<vmem>>, vector<1x9x128xf32>
      %190 = vector.shape_cast %189 : vector<1x9x128xf32> to vector<9x128xf32>
      %c0_81 = arith.constant 0 : index
      %c0_82 = arith.constant 0 : index
      %191 = vector.load %arg17[%c0_81, %c0_82] : memref<9x128xf32, #tpu.memory_space<vmem>>, vector<9x128xf32>
      tpu.vector_store %arg17[%c0_81, %c0_82], %190 {strides = array<i32>} : memref<9x128xf32, #tpu.memory_space<vmem>>, vector<9x128xf32>,
    } else {
    }
    %c0 = arith.constant 0 : index
    %c0_1 = arith.constant 0 : index
    %3 = vector.load %arg17[%c0, %c0_1] : memref<9x128xf32, #tpu.memory_space<vmem>>, vector<9x128xf32>
    %c0_2 = arith.constant 0 : index
    %c0_3 = arith.constant 0 : index
    %c0_4 = arith.constant 0 : index
    %4 = vector.load %arg3[%c0_2, %c0_3, %c0_4] : memref<1x1x9xf32, #tpu.memory_space<vmem>>, vector<1x1x9xf32>
    %5 = vector.shape_cast %4 : vector<1x1x9xf32> to vector<1x9xf32>
    %6 = vector.shape_cast %5 : vector<1x9xf32> to vector<1x9xf32>
    %7 = vector.broadcast %6 : vector<1x9xf32> to vector<9x9xf32>
    %c0_5 = arith.constant 0 : index
    %c0_6 = arith.constant 0 : index
    %c0_7 = arith.constant 0 : index
    %8 = vector.load %arg4[%c0_5, %c0_6, %c0_7] : memref<1x384x128xbf16, #tpu.memory_space<vmem>>, vector<1x384x128xbf16>
    %9 = vector.shape_cast %8 : vector<1x384x128xbf16> to vector<384x128xbf16>
    %10 = arith.truncf %3 : vector<9x128xf32> to vector<9x128xbf16>
    %cst = arith.constant dense<0.000000e+00> : vector<9x384xf32>
    %11 = tpu.matmul %10, %9, %cst {dimension_numbers = #tpu.dot_dimension_numbers<[1], [1], [0], [0], [0, 0, 1, 0], [], []>} : vector<9x128xbf16>, vector<384x128xbf16>, vector<9x384xf32> -> vector<9x384xf32>
    %c0_8 = arith.constant 0 : index
    %c0_9 = arith.constant 0 : index
    %c0_10 = arith.constant 0 : index
    %12 = vector.load %arg5[%c0_8, %c0_9, %c0_10] : memref<1x1x384xf32, #tpu.memory_space<vmem>>, vector<1x1x384xf32>
    %13 = vector.shape_cast %12 : vector<1x1x384xf32> to vector<1x384xf32>
    %14 = vector.broadcast %13 : vector<1x384xf32> to vector<9x384xf32>
    %15 = arith.addf %11, %14 : vector<9x384xf32>
    %16 = vector.extract_strided_slice %15 {offsets = [0, 0], sizes = [9, 32], strides = [1, 1]} : vector<9x384xf32> to vector<9x32xf32>
    %17 = arith.truncf %16 : vector<9x32xf32> to vector<9x32xbf16>
    %18 = vector.extract_strided_slice %15 {offsets = [0, 128], sizes = [9, 32], strides = [1, 1]} : vector<9x384xf32> to vector<9x32xf32>
    %19 = arith.truncf %18 : vector<9x32xf32> to vector<9x32xbf16>
    %20 = vector.extract_strided_slice %15 {offsets = [0, 256], sizes = [9, 32], strides = [1, 1]} : vector<9x384xf32> to vector<9x32xf32>
    %21 = arith.truncf %20 : vector<9x32xf32> to vector<9x32xbf16>
    %cst_11 = arith.constant dense<0.000000e+00> : vector<9x9xf32>
    %22 = tpu.matmul %17, %19, %cst_11 {dimension_numbers = #tpu.dot_dimension_numbers<[1], [1], [0], [0], [0, 0, 1, 0], [], []>} : vector<9x32xbf16>, vector<9x32xbf16>, vector<9x9xf32> -> vector<9x9xf32>
    %cst_12 = arith.constant 0.176776692 : f32
    %23 = vector.broadcast %cst_12 : f32 to vector<9x9xf32>
    %24 = arith.mulf %22, %23 : vector<9x9xf32>
    %25 = arith.addf %24, %7 : vector<9x9xf32>
    %cst_13 = arith.constant dense<0xFF800000> : vector<9xf32>
    %26 = vector.multi_reduction <maximumf>, %25, %cst_13 [1] : vector<9x9xf32> to vector<9xf32>
    %27 = vector.shape_cast %26 : vector<9xf32> to vector<9x1xf32>
    %28 = vector.broadcast %27 : vector<9x1xf32> to vector<9x9xf32>
    %29 = arith.subf %25, %28 : vector<9x9xf32>
    %30 = math.exp %29 : vector<9x9xf32>
    %cst_14 = arith.constant dense<0.000000e+00> : vector<9xf32>
    %31 = vector.multi_reduction <add>, %30, %cst_14 [1] : vector<9x9xf32> to vector<9xf32>
    %32 = vector.shape_cast %31 : vector<9xf32> to vector<9x1xf32>
    %33 = tpu.reciprocal %32 {approx = true} : vector<9x1xf32> -> vector<9x1xf32>
    %34 = vector.broadcast %33 : vector<9x1xf32> to vector<9x9xf32>
    %35 = arith.mulf %30, %34 : vector<9x9xf32>
    %36 = arith.truncf %35 : vector<9x9xf32> to vector<9x9xbf16>
    %cst_15 = arith.constant dense<0.000000e+00> : vector<9x32xf32>
    %37 = tpu.matmul %36, %21, %cst_15 {dimension_numbers = #tpu.dot_dimension_numbers<[1], [0], [0], [1], [0, 0, 1, 1], [], []>} : vector<9x9xbf16>, vector<9x32xbf16>, vector<9x32xf32> -> vector<9x32xf32>
    %38 = vector.extract_strided_slice %15 {offsets = [0, 32], sizes = [9, 32], strides = [1, 1]} : vector<9x384xf32> to vector<9x32xf32>
    %39 = arith.truncf %38 : vector<9x32xf32> to vector<9x32xbf16>
    %40 = vector.extract_strided_slice %15 {offsets = [0, 160], sizes = [9, 32], strides = [1, 1]} : vector<9x384xf32> to vector<9x32xf32>
    %41 = arith.truncf %40 : vector<9x32xf32> to vector<9x32xbf16>
    %42 = vector.extract_strided_slice %15 {offsets = [0, 288], sizes = [9, 32], strides = [1, 1]} : vector<9x384xf32> to vector<9x32xf32>
    %43 = arith.truncf %42 : vector<9x32xf32> to vector<9x32xbf16>
    %cst_16 = arith.constant dense<0.000000e+00> : vector<9x9xf32>
    %44 = tpu.matmul %39, %41, %cst_16 {dimension_numbers = #tpu.dot_dimension_numbers<[1], [1], [0], [0], [0, 0, 1, 0], [], []>} : vector<9x32xbf16>, vector<9x32xbf16>, vector<9x9xf32> -> vector<9x9xf32>
    %cst_17 = arith.constant 0.176776692 : f32
    %45 = vector.broadcast %cst_17 : f32 to vector<9x9xf32>
    %46 = arith.mulf %44, %45 : vector<9x9xf32>
    %47 = arith.addf %46, %7 : vector<9x9xf32>
    %cst_18 = arith.constant dense<0xFF800000> : vector<9xf32>
    %48 = vector.multi_reduction <maximumf>, %47, %cst_18 [1] : vector<9x9xf32> to vector<9xf32>
    %49 = vector.shape_cast %48 : vector<9xf32> to vector<9x1xf32>
    %50 = vector.broadcast %49 : vector<9x1xf32> to vector<9x9xf32>
    %51 = arith.subf %47, %50 : vector<9x9xf32>
    %52 = math.exp %51 : vector<9x9xf32>
    %cst_19 = arith.constant dense<0.000000e+00> : vector<9xf32>
    %53 = vector.multi_reduction <add>, %52, %cst_19 [1] : vector<9x9xf32> to vector<9xf32>
    %54 = vector.shape_cast %53 : vector<9xf32> to vector<9x1xf32>
    %55 = tpu.reciprocal %54 {approx = true} : vector<9x1xf32> -> vector<9x1xf32>
    %56 = vector.broadcast %55 : vector<9x1xf32> to vector<9x9xf32>
    %57 = arith.mulf %52, %56 : vector<9x9xf32>
    %58 = arith.truncf %57 : vector<9x9xf32> to vector<9x9xbf16>
    %cst_20 = arith.constant dense<0.000000e+00> : vector<9x32xf32>
    %59 = tpu.matmul %58, %43, %cst_20 {dimension_numbers = #tpu.dot_dimension_numbers<[1], [0], [0], [1], [0, 0, 1, 1], [], []>} : vector<9x9xbf16>, vector<9x32xbf16>, vector<9x32xf32> -> vector<9x32xf32>
    %60 = vector.extract_strided_slice %15 {offsets = [0, 64], sizes = [9, 32], strides = [1, 1]} : vector<9x384xf32> to vector<9x32xf32>
    %61 = arith.truncf %60 : vector<9x32xf32> to vector<9x32xbf16>
    %62 = vector.extract_strided_slice %15 {offsets = [0, 192], sizes = [9, 32], strides = [1, 1]} : vector<9x384xf32> to vector<9x32xf32>
    %63 = arith.truncf %62 : vector<9x32xf32> to vector<9x32xbf16>
    %64 = vector.extract_strided_slice %15 {offsets = [0, 320], sizes = [9, 32], strides = [1, 1]} : vector<9x384xf32> to vector<9x32xf32>
    %65 = arith.truncf %64 : vector<9x32xf32> to vector<9x32xbf16>
    %cst_21 = arith.constant dense<0.000000e+00> : vector<9x9xf32>
    %66 = tpu.matmul %61, %63, %cst_21 {dimension_numbers = #tpu.dot_dimension_numbers<[1], [1], [0], [0], [0, 0, 1, 0], [], []>} : vector<9x32xbf16>, vector<9x32xbf16>, vector<9x9xf32> -> vector<9x9xf32>
    %cst_22 = arith.constant 0.176776692 : f32
    %67 = vector.broadcast %cst_22 : f32 to vector<9x9xf32>
    %68 = arith.mulf %66, %67 : vector<9x9xf32>
    %69 = arith.addf %68, %7 : vector<9x9xf32>
    %cst_23 = arith.constant dense<0xFF800000> : vector<9xf32>
    %70 = vector.multi_reduction <maximumf>, %69, %cst_23 [1] : vector<9x9xf32> to vector<9xf32>
    %71 = vector.shape_cast %70 : vector<9xf32> to vector<9x1xf32>
    %72 = vector.broadcast %71 : vector<9x1xf32> to vector<9x9xf32>
    %73 = arith.subf %69, %72 : vector<9x9xf32>
    %74 = math.exp %73 : vector<9x9xf32>
    %cst_24 = arith.constant dense<0.000000e+00> : vector<9xf32>
    %75 = vector.multi_reduction <add>, %74, %cst_24 [1] : vector<9x9xf32> to vector<9xf32>
    %76 = vector.shape_cast %75 : vector<9xf32> to vector<9x1xf32>
    %77 = tpu.reciprocal %76 {approx = true} : vector<9x1xf32> -> vector<9x1xf32>
    %78 = vector.broadcast %77 : vector<9x1xf32> to vector<9x9xf32>
    %79 = arith.mulf %74, %78 : vector<9x9xf32>
    %80 = arith.truncf %79 : vector<9x9xf32> to vector<9x9xbf16>
    %cst_25 = arith.constant dense<0.000000e+00> : vector<9x32xf32>
    %81 = tpu.matmul %80, %65, %cst_25 {dimension_numbers = #tpu.dot_dimension_numbers<[1], [0], [0], [1], [0, 0, 1, 1], [], []>} : vector<9x9xbf16>, vector<9x32xbf16>, vector<9x32xf32> -> vector<9x32xf32>
    %82 = vector.extract_strided_slice %15 {offsets = [0, 96], sizes = [9, 32], strides = [1, 1]} : vector<9x384xf32> to vector<9x32xf32>
    %83 = arith.truncf %82 : vector<9x32xf32> to vector<9x32xbf16>
    %84 = vector.extract_strided_slice %15 {offsets = [0, 224], sizes = [9, 32], strides = [1, 1]} : vector<9x384xf32> to vector<9x32xf32>
    %85 = arith.truncf %84 : vector<9x32xf32> to vector<9x32xbf16>
    %86 = vector.extract_strided_slice %15 {offsets = [0, 352], sizes = [9, 32], strides = [1, 1]} : vector<9x384xf32> to vector<9x32xf32>
    %87 = arith.truncf %86 : vector<9x32xf32> to vector<9x32xbf16>
    %cst_26 = arith.constant dense<0.000000e+00> : vector<9x9xf32>
    %88 = tpu.matmul %83, %85, %cst_26 {dimension_numbers = #tpu.dot_dimension_numbers<[1], [1], [0], [0], [0, 0, 1, 0], [], []>} : vector<9x32xbf16>, vector<9x32xbf16>, vector<9x9xf32> -> vector<9x9xf32>
    %cst_27 = arith.constant 0.176776692 : f32
    %89 = vector.broadcast %cst_27 : f32 to vector<9x9xf32>
    %90 = arith.mulf %88, %89 : vector<9x9xf32>
    %91 = arith.addf %90, %7 : vector<9x9xf32>
    %cst_28 = arith.constant dense<0xFF800000> : vector<9xf32>
    %92 = vector.multi_reduction <maximumf>, %91, %cst_28 [1] : vector<9x9xf32> to vector<9xf32>
    %93 = vector.shape_cast %92 : vector<9xf32> to vector<9x1xf32>
    %94 = vector.broadcast %93 : vector<9x1xf32> to vector<9x9xf32>
    %95 = arith.subf %91, %94 : vector<9x9xf32>
    %96 = math.exp %95 : vector<9x9xf32>
    %cst_29 = arith.constant dense<0.000000e+00> : vector<9xf32>
    %97 = vector.multi_reduction <add>, %96, %cst_29 [1] : vector<9x9xf32> to vector<9xf32>
    %98 = vector.shape_cast %97 : vector<9xf32> to vector<9x1xf32>
    %99 = tpu.reciprocal %98 {approx = true} : vector<9x1xf32> -> vector<9x1xf32>
    %100 = vector.broadcast %99 : vector<9x1xf32> to vector<9x9xf32>
    %101 = arith.mulf %96, %100 : vector<9x9xf32>
    %102 = arith.truncf %101 : vector<9x9xf32> to vector<9x9xbf16>
    %cst_30 = arith.constant dense<0.000000e+00> : vector<9x32xf32>
    %103 = tpu.matmul %102, %87, %cst_30 {dimension_numbers = #tpu.dot_dimension_numbers<[1], [0], [0], [1], [0, 0, 1, 1], [], []>} : vector<9x9xbf16>, vector<9x32xbf16>, vector<9x32xf32> -> vector<9x32xf32>
    %104 = tpu.concatenate %37, %59, %81, %103 in 1 : vector<9x32xf32>, vector<9x32xf32>, vector<9x32xf32>, vector<9x32xf32> -> vector<9x128xf32>
    %c0_31 = arith.constant 0 : index
    %c0_32 = arith.constant 0 : index
    %c0_33 = arith.constant 0 : index
    %105 = vector.load %arg6[%c0_31, %c0_32, %c0_33] : memref<1x128x128xbf16, #tpu.memory_space<vmem>>, vector<1x128x128xbf16>
    %106 = vector.shape_cast %105 : vector<1x128x128xbf16> to vector<128x128xbf16>
    %107 = arith.truncf %104 : vector<9x128xf32> to vector<9x128xbf16>
    %cst_34 = arith.constant dense<0.000000e+00> : vector<9x128xf32>
    %108 = tpu.matmul %107, %106, %cst_34 {dimension_numbers = #tpu.dot_dimension_numbers<[1], [1], [0], [0], [0, 0, 1, 0], [], []>} : vector<9x128xbf16>, vector<128x128xbf16>, vector<9x128xf32> -> vector<9x128xf32>
    %c0_35 = arith.constant 0 : index
    %c0_36 = arith.constant 0 : index
    %c0_37 = arith.constant 0 : index
    %109 = vector.load %arg7[%c0_35, %c0_36, %c0_37] : memref<1x1x128xf32, #tpu.memory_space<vmem>>, vector<1x1x128xf32>
    %110 = vector.shape_cast %109 : vector<1x1x128xf32> to vector<1x128xf32>
    %111 = vector.broadcast %110 : vector<1x128xf32> to vector<9x128xf32>
    %112 = arith.addf %108, %111 : vector<9x128xf32>
    %113 = arith.addf %3, %112 : vector<9x128xf32>
    %c0_38 = arith.constant 0 : index
    %c0_39 = arith.constant 0 : index
    %c0_40 = arith.constant 0 : index
    %114 = vector.load %arg12[%c0_38, %c0_39, %c0_40] : memref<1x1x128xf32, #tpu.memory_space<vmem>>, vector<1x1x128xf32>
    %115 = vector.shape_cast %114 : vector<1x1x128xf32> to vector<1x128xf32>
    %c0_41 = arith.constant 0 : index
    %c0_42 = arith.constant 0 : index
    %c0_43 = arith.constant 0 : index
    %116 = vector.load %arg13[%c0_41, %c0_42, %c0_43] : memref<1x1x128xf32, #tpu.memory_space<vmem>>, vector<1x1x128xf32>
    %117 = vector.shape_cast %116 : vector<1x1x128xf32> to vector<1x128xf32>
    %cst_44 = arith.constant dense<0.000000e+00> : vector<9xf32>
    %118 = vector.multi_reduction <add>, %113, %cst_44 [1] : vector<9x128xf32> to vector<9xf32>
    %119 = vector.shape_cast %118 : vector<9xf32> to vector<9x1xf32>
    %cst_45 = arith.constant 1.280000e+02 : f32
    %120 = vector.broadcast %cst_45 : f32 to vector<9x1xf32>
    %121 = arith.divf %119, %120 : vector<9x1xf32>
    %122 = vector.broadcast %121 : vector<9x1xf32> to vector<9x128xf32>
    %123 = arith.subf %113, %122 : vector<9x128xf32>
    %124 = arith.mulf %123, %123 : vector<9x128xf32>
    %cst_46 = arith.constant dense<0.000000e+00> : vector<9xf32>
    %125 = vector.multi_reduction <add>, %124, %cst_46 [1] : vector<9x128xf32> to vector<9xf32>
    %126 = vector.shape_cast %125 : vector<9xf32> to vector<9x1xf32>
    %cst_47 = arith.constant 1.280000e+02 : f32
    %127 = vector.broadcast %cst_47 : f32 to vector<9x1xf32>
    %128 = arith.divf %126, %127 : vector<9x1xf32>
    %129 = vector.broadcast %121 : vector<9x1xf32> to vector<9x128xf32>
    %130 = arith.subf %113, %129 : vector<9x128xf32>
    %cst_48 = arith.constant 9.99999974E-6 : f32
    %131 = vector.broadcast %cst_48 : f32 to vector<9x1xf32>
    %132 = arith.addf %128, %131 : vector<9x1xf32>
    %133 = math.rsqrt %132 : vector<9x1xf32>
    %134 = vector.broadcast %133 : vector<9x1xf32> to vector<9x128xf32>
    %135 = arith.mulf %130, %134 : vector<9x128xf32>
    %136 = vector.broadcast %115 : vector<1x128xf32> to vector<9x128xf32>
    %137 = arith.mulf %135, %136 : vector<9x128xf32>
    %138 = vector.broadcast %117 : vector<1x128xf32> to vector<9x128xf32>
    %139 = arith.addf %137, %138 : vector<9x128xf32>
    %c0_49 = arith.constant 0 : index
    %c0_50 = arith.constant 0 : index
    %c0_51 = arith.constant 0 : index
    %140 = vector.load %arg8[%c0_49, %c0_50, %c0_51] : memref<1x128x128xbf16, #tpu.memory_space<vmem>>, vector<1x128x128xbf16>
    %141 = vector.shape_cast %140 : vector<1x128x128xbf16> to vector<128x128xbf16>
    %142 = arith.truncf %139 : vector<9x128xf32> to vector<9x128xbf16>
    %cst_52 = arith.constant dense<0.000000e+00> : vector<9x128xf32>
    %143 = tpu.matmul %142, %141, %cst_52 {dimension_numbers = #tpu.dot_dimension_numbers<[1], [1], [0], [0], [0, 0, 1, 0], [], []>} : vector<9x128xbf16>, vector<128x128xbf16>, vector<9x128xf32> -> vector<9x128xf32>
    %c0_53 = arith.constant 0 : index
    %c0_54 = arith.constant 0 : index
    %c0_55 = arith.constant 0 : index
    %144 = vector.load %arg9[%c0_53, %c0_54, %c0_55] : memref<1x1x128xf32, #tpu.memory_space<vmem>>, vector<1x1x128xf32>
    %145 = vector.shape_cast %144 : vector<1x1x128xf32> to vector<1x128xf32>
    %146 = vector.broadcast %145 : vector<1x128xf32> to vector<9x128xf32>
    %147 = arith.addf %143, %146 : vector<9x128xf32>
    %cst_56 = arith.constant 0.000000e+00 : f32
    %148 = vector.broadcast %cst_56 : f32 to vector<9x128xf32>
    %149 = arith.maximumf %147, %148 : vector<9x128xf32>
    %c0_57 = arith.constant 0 : index
    %c0_58 = arith.constant 0 : index
    %c0_59 = arith.constant 0 : index
    %150 = vector.load %arg10[%c0_57, %c0_58, %c0_59] : memref<1x128x128xbf16, #tpu.memory_space<vmem>>, vector<1x128x128xbf16>
    %151 = vector.shape_cast %150 : vector<1x128x128xbf16> to vector<128x128xbf16>
    %152 = arith.truncf %149 : vector<9x128xf32> to vector<9x128xbf16>
    %cst_60 = arith.constant dense<0.000000e+00> : vector<9x128xf32>
    %153 = tpu.matmul %152, %151, %cst_60 {dimension_numbers = #tpu.dot_dimension_numbers<[1], [1], [0], [0], [0, 0, 1, 0], [], []>} : vector<9x128xbf16>, vector<128x128xbf16>, vector<9x128xf32> -> vector<9x128xf32>
    %c0_61 = arith.constant 0 : index
    %c0_62 = arith.constant 0 : index
    %c0_63 = arith.constant 0 : index
    %154 = vector.load %arg11[%c0_61, %c0_62, %c0_63] : memref<1x1x128xf32, #tpu.memory_space<vmem>>, vector<1x1x128xf32>
    %155 = vector.shape_cast %154 : vector<1x1x128xf32> to vector<1x128xf32>
    %156 = vector.broadcast %155 : vector<1x128xf32> to vector<9x128xf32>
    %157 = arith.addf %153, %156 : vector<9x128xf32>
    %158 = arith.addf %139, %157 : vector<9x128xf32>
    %c0_64 = arith.constant 0 : index
    %c0_65 = arith.constant 0 : index
    %c0_66 = arith.constant 0 : index
    %159 = vector.load %arg14[%c0_64, %c0_65, %c0_66] : memref<1x1x128xf32, #tpu.memory_space<vmem>>, vector<1x1x128xf32>
    %160 = vector.shape_cast %159 : vector<1x1x128xf32> to vector<1x128xf32>
    %c0_67 = arith.constant 0 : index
    %c0_68 = arith.constant 0 : index
    %c0_69 = arith.constant 0 : index
    %161 = vector.load %arg15[%c0_67, %c0_68, %c0_69] : memref<1x1x128xf32, #tpu.memory_space<vmem>>, vector<1x1x128xf32>
    %162 = vector.shape_cast %161 : vector<1x1x128xf32> to vector<1x128xf32>
    %cst_70 = arith.constant dense<0.000000e+00> : vector<9xf32>
    %163 = vector.multi_reduction <add>, %158, %cst_70 [1] : vector<9x128xf32> to vector<9xf32>
    %164 = vector.shape_cast %163 : vector<9xf32> to vector<9x1xf32>
    %cst_71 = arith.constant 1.280000e+02 : f32
    %165 = vector.broadcast %cst_71 : f32 to vector<9x1xf32>
    %166 = arith.divf %164, %165 : vector<9x1xf32>
    %167 = vector.broadcast %166 : vector<9x1xf32> to vector<9x128xf32>
    %168 = arith.subf %158, %167 : vector<9x128xf32>
    %169 = arith.mulf %168, %168 : vector<9x128xf32>
    %cst_72 = arith.constant dense<0.000000e+00> : vector<9xf32>
    %170 = vector.multi_reduction <add>, %169, %cst_72 [1] : vector<9x128xf32> to vector<9xf32>
    %171 = vector.shape_cast %170 : vector<9xf32> to vector<9x1xf32>
    %cst_73 = arith.constant 1.280000e+02 : f32
    %172 = vector.broadcast %cst_73 : f32 to vector<9x1xf32>
    %173 = arith.divf %171, %172 : vector<9x1xf32>
    %174 = vector.broadcast %166 : vector<9x1xf32> to vector<9x128xf32>
    %175 = arith.subf %158, %174 : vector<9x128xf32>
    %cst_74 = arith.constant 9.99999974E-6 : f32
    %176 = vector.broadcast %cst_74 : f32 to vector<9x1xf32>
    %177 = arith.addf %173, %176 : vector<9x1xf32>
    %178 = math.rsqrt %177 : vector<9x1xf32>
    %179 = vector.broadcast %178 : vector<9x1xf32> to vector<9x128xf32>
    %180 = arith.mulf %175, %179 : vector<9x128xf32>
    %181 = vector.broadcast %160 : vector<1x128xf32> to vector<9x128xf32>
    %182 = arith.mulf %180, %181 : vector<9x128xf32>
    %183 = vector.broadcast %162 : vector<1x128xf32> to vector<9x128xf32>
    %184 = arith.addf %182, %183 : vector<9x128xf32>
    %c0_75 = arith.constant 0 : index
    %c0_76 = arith.constant 0 : index
    %185 = vector.load %arg17[%c0_75, %c0_76] : memref<9x128xf32, #tpu.memory_space<vmem>>, vector<9x128xf32>
    tpu.vector_store %arg17[%c0_75, %c0_76], %184 {strides = array<i32>} : memref<9x128xf32, #tpu.memory_space<vmem>>, vector<9x128xf32>,
    %c1_i32 = arith.constant 1 : i32
    %186 = arith.cmpi eq, %arg1, %c1_i32 : i32
    %187 = arith.extui %186 : i1 to i32
    %c0_i32_77 = arith.constant 0 : i32
    %188 = arith.cmpi ne, %187, %c0_i32_77 : i32
    scf.if %188 {
      %c0_78 = arith.constant 0 : index
      %c0_79 = arith.constant 0 : index
      %c0_80 = arith.constant 0 : index
      %189 = vector.load %arg16[%c0_78, %c0_79, %c0_80] : memref<1x9x128xf32, #tpu.memory_space<vmem>>, vector<1x9x128xf32>
      %190 = vector.shape_cast %189 : vector<1x9x128xf32> to vector<9x128xf32>
      %191 = vector.shape_cast %184 : vector<9x128xf32> to vector<1x9x128xf32>
      tpu.vector_store %arg16[%c0_78, %c0_79, %c0_80], %191 {strides = array<i32>} : memref<1x9x128xf32, #tpu.memory_space<vmem>>, vector<1x9x128xf32>,
    } else {
    }
    return
  }
  func.func @transform_0(%arg0: i32, %arg1: i32) -> (i32, i32, i32) {
    %c0_i32 = arith.constant 0 : i32
    %c0_i32_0 = arith.constant 0 : i32
    %c0_i32_1 = arith.constant 0 : i32
    return %arg0, %c0_i32, %c0_i32_0 : i32, i32, i32
  }
  func.func @transform_1(%arg0: i32, %arg1: i32) -> (i32, i32, i32) {
    %c0_i32 = arith.constant 0 : i32
    %c0_i32_0 = arith.constant 0 : i32
    %c0_i32_1 = arith.constant 0 : i32
    return %arg0, %c0_i32, %c0_i32_0 : i32, i32, i32
  }
  func.func @transform_2(%arg0: i32, %arg1: i32) -> (i32, i32, i32) {
    %c0_i32 = arith.constant 0 : i32
    %c0_i32_0 = arith.constant 0 : i32
    %c0_i32_1 = arith.constant 0 : i32
    return %arg1, %c0_i32, %c0_i32_0 : i32, i32, i32
  }
  func.func @transform_3(%arg0: i32, %arg1: i32) -> (i32, i32, i32) {
    %c0_i32 = arith.constant 0 : i32
    %c0_i32_0 = arith.constant 0 : i32
    %c0_i32_1 = arith.constant 0 : i32
    return %arg1, %c0_i32, %c0_i32_0 : i32, i32, i32
  }
  func.func @transform_4(%arg0: i32, %arg1: i32) -> (i32, i32, i32) {
    %c0_i32 = arith.constant 0 : i32
    %c0_i32_0 = arith.constant 0 : i32
    %c0_i32_1 = arith.constant 0 : i32
    return %arg1, %c0_i32, %c0_i32_0 : i32, i32, i32
  }
  func.func @transform_5(%arg0: i32, %arg1: i32) -> (i32, i32, i32) {
    %c0_i32 = arith.constant 0 : i32
    %c0_i32_0 = arith.constant 0 : i32
    %c0_i32_1 = arith.constant 0 : i32
    return %arg1, %c0_i32, %c0_i32_0 : i32, i32, i32
  }
  func.func @transform_6(%arg0: i32, %arg1: i32) -> (i32, i32, i32) {
    %c0_i32 = arith.constant 0 : i32
    %c0_i32_0 = arith.constant 0 : i32
    %c0_i32_1 = arith.constant 0 : i32
    return %arg1, %c0_i32, %c0_i32_0 : i32, i32, i32
  }
  func.func @transform_7(%arg0: i32, %arg1: i32) -> (i32, i32, i32) {
    %c0_i32 = arith.constant 0 : i32
    %c0_i32_0 = arith.constant 0 : i32
    %c0_i32_1 = arith.constant 0 : i32
    return %arg1, %c0_i32, %c0_i32_0 : i32, i32, i32
  }
  func.func @transform_8(%arg0: i32, %arg1: i32) -> (i32, i32, i32) {
    %c0_i32 = arith.constant 0 : i32
    %c0_i32_0 = arith.constant 0 : i32
    %c0_i32_1 = arith.constant 0 : i32
    return %arg1, %c0_i32, %c0_i32_0 : i32, i32, i32
  }
  func.func @transform_9(%arg0: i32, %arg1: i32) -> (i32, i32, i32) {
    %c0_i32 = arith.constant 0 : i32
    %c0_i32_0 = arith.constant 0 : i32
    %c0_i32_1 = arith.constant 0 : i32
    return %arg1, %c0_i32, %c0_i32_0 : i32, i32, i32
  }
  func.func @transform_10(%arg0: i32, %arg1: i32) -> (i32, i32, i32) {
    %c0_i32 = arith.constant 0 : i32
    %c0_i32_0 = arith.constant 0 : i32
    %c0_i32_1 = arith.constant 0 : i32
    return %arg1, %c0_i32, %c0_i32_0 : i32, i32, i32
  }
  func.func @transform_11(%arg0: i32, %arg1: i32) -> (i32, i32, i32) {
    %c0_i32 = arith.constant 0 : i32
    %c0_i32_0 = arith.constant 0 : i32
    %c0_i32_1 = arith.constant 0 : i32
    return %arg1, %c0_i32, %c0_i32_0 : i32, i32, i32
  }
  func.func @transform_12(%arg0: i32, %arg1: i32) -> (i32, i32, i32) {
    %c0_i32 = arith.constant 0 : i32
    %c0_i32_0 = arith.constant 0 : i32
    %c0_i32_1 = arith.constant 0 : i32
    return %arg1, %c0_i32, %c0_i32_0 : i32, i32, i32
  }
  func.func @transform_13(%arg0: i32, %arg1: i32) -> (i32, i32, i32) {
    %c0_i32 = arith.constant 0 : i32
    %c0_i32_0 = arith.constant 0 : i32
    %c0_i32_1 = arith.constant 0 : i32
    return %arg1, %c0_i32, %c0_i32_0 : i32, i32, i32
  }
  func.func @transform_14(%arg0: i32, %arg1: i32) -> (i32, i32, i32) {
    %c0_i32 = arith.constant 0 : i32
    %c0_i32_0 = arith.constant 0 : i32
    %c0_i32_1 = arith.constant 0 : i32
    return %arg0, %c0_i32, %c0_i32_0 : i32, i32, i32
  }
}

</mosaic_0001>

<llo_original>
// kernel: forward.2
$region0: #{forward.2}
  #allocation0 [shape = 'u32[]', space=smem, size = 0x4, offset = 0x4, fixed_abs, tag = 'smem constant byte address 0x4 - core index']
  #allocation1 [shape = 'u32[72,128]{1,0:T(1,128)}', space=vmem, size = 0x9000, scoped, tag = 'internal scratch']
  %s0 = inlined_call_operand.vmem [shape: f32[16,64], index: 0, kind: input, shape index: {}]
  %s1 = inlined_call_operand.vmem [shape: bf16[128,64], index: 1, kind: input, shape index: {}]
  %s2 = inlined_call_operand.vmem [shape: f32[1,128], index: 2, kind: input, shape index: {}]
  %s3 = inlined_call_operand.vmem [shape: f32[16,128], index: 3, kind: output, shape index: {}]
  %s4 = sld [smem:[#allocation0]]
  $region22: #{forward.2} parent=0
    _
  %s6 = ssub.s32 1, %s4
  %s7 = scalar_select 0, %s6, %s4
  // Predicated region
  $region2: #{forward.2} parent=0 // pred_check
    _
  $region3: #{forward.2} parent=0 // pred_check_branch
    %9 = sbr.rel (0) target = $region5
  $region4: #{forward.2} parent=0 // pred_region
    _
  $region5: #{forward.2} parent=0 // pred_fallthru
    _
  // Predicated region
  $region6: #{forward.2} parent=0 // pred_check
    _
  $region7: #{forward.2} parent=0 // pred_check_branch
    %11 = sbr.rel (0) target = $region9
  $region8: #{forward.2} parent=0 // pred_region
    _
  $region9: #{forward.2} parent=0 // pred_fallthru
    _
  // Predicated region
  $region10: #{forward.2} parent=0 // pred_check
    _
  $region11: #{forward.2} parent=0 // pred_check_branch
    %13 = sbr.rel (0) target = $region13
  $region12: #{forward.2} parent=0 // pred_region
    _
  $region13: #{forward.2} parent=0 // pred_fallthru
    _
  %v14 = vld [vmem:[%s0] sm:$0xff]
  %v15 = vld [vmem:[%s0 + $0x8] sm:$0xff]
  %v16 = vpack.c.bf16 %v15, %v14
  %v17 = vld [vmem:[%s1] sm:$0xf]
  %v18 = vld [vmem:[%s1 + $0x4] sm:$0xf]
  %v19 = vld [vmem:[%s1 + $0x8] sm:$0xf]
  %v20 = vld [vmem:[%s1 + $0xc] sm:$0xf]
  %v21 = vld [vmem:[%s1 + $0x10] sm:$0xf]
  %v22 = vld [vmem:[%s1 + $0x14] sm:$0xf]
  %v23 = vld [vmem:[%s1 + $0x18] sm:$0xf]
  %v24 = vld [vmem:[%s1 + $0x1c] sm:$0xf]
  %v25 = vld [vmem:[%s1 + $0x20] sm:$0xf]
  %v26 = vld [vmem:[%s1 + $0x24] sm:$0xf]
  %v27 = vld [vmem:[%s1 + $0x28] sm:$0xf]
  %v28 = vld [vmem:[%s1 + $0x2c] sm:$0xf]
  %v29 = vld [vmem:[%s1 + $0x30] sm:$0xf]
  %v30 = vld [vmem:[%s1 + $0x34] sm:$0xf]
  %v31 = vld [vmem:[%s1 + $0x38] sm:$0xf]
  %v32 = vld [vmem:[%s1 + $0x3c] sm:$0xf]
  %v33 = vld [vmem:[%s2] sm:$0x1]
  %v35 = vperm.slane %v33, 0
  %v53 = vunpack.c.l.b16 %v17
  %v54 = vunpack.c.l.b16 %v18
  %v55 = vunpack.c.l.b16 %v19
  %v56 = vunpack.c.l.b16 %v20
  %v57 = vunpack.c.l.b16 %v21
  %v58 = vunpack.c.l.b16 %v22
  %v59 = vunpack.c.l.b16 %v23
  %v60 = vunpack.c.l.b16 %v24
  %v61 = vunpack.c.l.b16 %v25
  %v62 = vunpack.c.l.b16 %v26
  %v63 = vunpack.c.l.b16 %v27
  %v64 = vunpack.c.l.b16 %v28
  %v65 = vunpack.c.l.b16 %v29
  %v66 = vunpack.c.l.b16 %v30
  %v67 = vunpack.c.l.b16 %v31
  %v68 = vunpack.c.l.b16 %v32
  %v69 = vpack.c.b16 %v54, %v53
  %v70 = vpack.c.b16 %v56, %v55
  %v71 = vpack.c.b16 %v58, %v57
  %v72 = vpack.c.b16 %v60, %v59
  %v73 = vpack.c.b16 %v62, %v61
  %v74 = vpack.c.b16 %v64, %v63
  %v75 = vpack.c.b16 %v66, %v65
  %v76 = vpack.c.b16 %v68, %v67
  %vm77 = vcmask 523264
  %v79 = vsel %vm77, %v16, 0
  %v82 = vsel %vm77, %v69, 0
  %v85 = vsel %vm77, %v70, 0
  %v88 = vsel %vm77, %v71, 0
  %v91 = vsel %vm77, %v72, 0
  %v94 = vsel %vm77, %v73, 0
  %v97 = vsel %vm77, %v74, 0
  %v100 = vsel %vm77, %v75, 0
  %v103 = vsel %vm77, %v76, 0
  %105 = vmatpush.bf16.xpose.msra.mxu0 %v103
  %106 = vmatpush.bf16.xpose.msra.mxu0 %v100
  %107 = vmatpush.bf16.xpose.msra.mxu0 %v97
  %108 = vmatpush.bf16.xpose.msra.mxu0 %v94
  %109 = vmatpush.bf16.xpose.msra.mxu0 %v91
  %110 = vmatpush.bf16.xpose.msra.mxu0 %v88
  %111 = vmatpush.bf16.xpose.msra.mxu0 %v85
  %112 = vmatpush.bf16.xpose.msra.mxu0 %v82
  %113 = vmatmul.bf16.gmra.mxu0 %v79
  %v114 = vpop.f32.mrf.mxu0
  %v115 = vadd.f32 %v35, %v114
  %v116 = vpop.f32.mrf.mxu0
  %v117 = vadd.f32 %v35, %v116
  %118 = vdwg.mxu0
  %119 = vst [vmem:[%s3] sm:$0xff] %v115
  %120 = vst [vmem:[%s3 + $0x8] sm:$0xff] %v117
  // Predicated region
  $region14: #{forward.2} parent=0 // pred_check
    _
  $region15: #{forward.2} parent=0 // pred_check_branch
    %122 = sbr.rel (0) target = $region17
  $region16: #{forward.2} parent=0 // pred_region
    _
  $region17: #{forward.2} parent=0 // pred_fallthru
    _
  // Predicated region
  $region18: #{forward.2} parent=0 // pred_check
    _
  $region19: #{forward.2} parent=0 // pred_check_branch
    %124 = sbr.rel (0) target = $region21
  $region20: #{forward.2} parent=0 // pred_region
    _
  $region21: #{forward.2} parent=0 // pred_fallthru
    _

// kernel: forward.3
$region0: #{forward.3}
  #allocation0 [shape = 'u32[]', space=smem, size = 0x4, offset = 0x4, fixed_abs, tag = 'smem constant byte address 0x4 - core index']
  #allocation1 [shape = 'u32[72,128]{1,0:T(1,128)}', space=vmem, size = 0x9000, scoped, tag = 'internal scratch']
  #allocation2 [shape = 'f32[9,128]{1,0:T(8,128)}', space=vmem, size = 0x2000, scoped, tag = 'scratch operand']
  %s0 = inlined_call_operand.vmem [shape: f32[2,9,128], index: 0, kind: input, shape index: {}]
  %s1 = inlined_call_operand.vmem [shape: f32[2,1,9], index: 1, kind: input, shape index: {}]
  %s2 = inlined_call_operand.vmem [shape: bf16[2,384,128], index: 2, kind: input, shape index: {}]
  %s3 = inlined_call_operand.vmem [shape: f32[2,1,384], index: 3, kind: input, shape index: {}]
  %s4 = inlined_call_operand.vmem [shape: bf16[2,128,128], index: 4, kind: input, shape index: {}]
  %s5 = inlined_call_operand.vmem [shape: f32[2,1,128], index: 5, kind: input, shape index: {}]
  %s6 = inlined_call_operand.vmem [shape: bf16[2,128,128], index: 6, kind: input, shape index: {}]
  %s7 = inlined_call_operand.vmem [shape: f32[2,1,128], index: 7, kind: input, shape index: {}]
  %s8 = inlined_call_operand.vmem [shape: bf16[2,128,128], index: 8, kind: input, shape index: {}]
  %s9 = inlined_call_operand.vmem [shape: f32[2,1,128], index: 9, kind: input, shape index: {}]
  %s10 = inlined_call_operand.vmem [shape: f32[2,1,128], index: 10, kind: input, shape index: {}]
  %s11 = inlined_call_operand.vmem [shape: f32[2,1,128], index: 11, kind: input, shape index: {}]
  %s12 = inlined_call_operand.vmem [shape: f32[2,1,128], index: 12, kind: input, shape index: {}]
  %s13 = inlined_call_operand.vmem [shape: f32[2,1,128], index: 13, kind: input, shape index: {}]
  %s14 = inlined_call_operand.vmem [shape: f32[2,9,128], index: 14, kind: output, shape index: {}]
  %s15 = sld [smem:[#allocation0]]
  $region97: #{forward.3} parent=0
    _
  %s17 = ssub.s32 1, %s15
  %s18 = scalar_select 0, %s17, %s15
  loop: start=0, step=1, limit=6
  $region2: #{forward.3} parent=0 // loop_pre_header
    _
  $region3: #{forward.3} parent=0 // loop_header
    %s20 = sphi 0, %s24
    %p21 = scmp.ge.s32.totalorder %s20, 6
    %s27 = sphi 0, %s39
    %s28 = sphi 0, %s35
    %s29 = sphi 0, %s27
    %s30 = sphi 0, %s28
    %s31 = sphi 0, %s29
    %s32 = sphi 0, %s30
    %s42 = sphi 0, %s44
    %s45 = sphi 0, %s42
    %s46 = sphi 0, %s45
    %s62 = sphi 0, %s46
    %s68 = sphi 0, %s70
    %s71 = sphi 0, %s68
    %s72 = sphi 0, %s71
    %s88 = sphi 0, %s72
    %s94 = sphi 0, %s96
    %s97 = sphi 0, %s94
    %s98 = sphi 0, %s97
    %s114 = sphi 0, %s98
    %s120 = sphi 0, %s122
    %s123 = sphi 0, %s120
    %s124 = sphi 0, %s123
    %s140 = sphi 0, %s124
    %s146 = sphi 0, %s148
    %s149 = sphi 0, %s146
    %s150 = sphi 0, %s149
    %s166 = sphi 0, %s150
    %s172 = sphi 0, %s174
    %s175 = sphi 0, %s172
    %s176 = sphi 0, %s175
    %s192 = sphi 0, %s176
    %s198 = sphi 0, %s200
    %s201 = sphi 0, %s198
    %s202 = sphi 0, %s201
    %s218 = sphi 0, %s202
    %s224 = sphi 0, %s226
    %s227 = sphi 0, %s224
    %s228 = sphi 0, %s227
    %s244 = sphi 0, %s228
    %s250 = sphi 0, %s252
    %s253 = sphi 0, %s250
    %s254 = sphi 0, %s253
    %s270 = sphi 0, %s254
    %s276 = sphi 0, %s278
    %s279 = sphi 0, %s276
    %s280 = sphi 0, %s279
    %s296 = sphi 0, %s280
    %s302 = sphi 0, %s304
    %s305 = sphi 0, %s302
    %s306 = sphi 0, %s305
    %s322 = sphi 0, %s306
    %s328 = sphi 0, %s330
    %s331 = sphi 0, %s328
    %s332 = sphi 0, %s331
    %s348 = sphi 0, %s332
    %s354 = sphi 0, %s356
    %s357 = sphi 0, %s354
    %s358 = sphi 0, %s357
    %s374 = sphi 0, %s358
    %s380 = sphi 0, %s382
    %s383 = sphi 0, %s380
    %s384 = sphi 0, %s383
    %s400 = sphi 0, %s384
    %s406 = sphi 0, %s408
    %s409 = sphi 0, %s406
    %s410 = sphi 0, %s409
    %s426 = sphi 0, %s410
  $region4: #{forward.3} parent=0 // loop_header_branch
    %23 = sbr.rel (%p21) target = $region8
  $region5: #{forward.3} parent=0 // loop_body
    %s25 = ssub.s32 %s20, 1
    %s26 = ssub.s32 %s20, 2
    %s33 = sadd.s32 1, %s28
    %p34 = scmp.ge.s32.totalorder %s33, 2
    %s35 = scalar_select %p34, 0, %s33
    %s36 = sadd.s32 1, %s27
    %s37 = scalar_select %p34, %s36, %s27
    %p38 = scmp.ge.s32.totalorder %s37, 2
    %s39 = scalar_select %p38, 0, %s37
    %s40 = ssub.s32 %s27, %s39
    %p41 = scmp.eq.s32.totalorder %s40, 0
    %s43 = sadd.s32 %s42, 1
    %s44 = scalar_select %p41, %s42, %s43
    %p47 = pneg %p41
    %p48 = scmp.eq.s32.totalorder %s20, 3
    %p49 = por %p47, %p48
    %p50 = scmp.ne.s32.totalorder %s42, %s45
    %p51 = scmp.eq.s32.totalorder %s20, 0
    %p52 = por %p50, %p51
    %p53 = scmp.ne.s32.totalorder %s42, %s45
    %p54 = scmp.eq.s32.totalorder %s25, 3
    %p55 = por %p53, %p54
    %p56 = scmp.ne.s32.totalorder %s45, %s46
    %p57 = scmp.eq.s32.totalorder %s25, 0
    %p58 = por %p56, %p57
    %p59 = scmp.ne.s32.totalorder %s45, %s46
    %p60 = scmp.eq.s32.totalorder %s26, 3
    %p61 = por %p59, %p60
    %p63 = scmp.ne.s32.totalorder %s46, %s62
    %p64 = scmp.eq.s32.totalorder %s26, 0
    %p65 = por %p63, %p64
    %s66 = ssub.s32 %s27, %s39
    %p67 = scmp.eq.s32.totalorder %s66, 0
    %s69 = sadd.s32 %s68, 1
    %s70 = scalar_select %p67, %s68, %s69
    %p73 = pneg %p67
    %p74 = scmp.eq.s32.totalorder %s20, 3
    %p75 = por %p73, %p74
    %p76 = scmp.ne.s32.totalorder %s68, %s71
    %p77 = scmp.eq.s32.totalorder %s20, 0
    %p78 = por %p76, %p77
    %p79 = scmp.ne.s32.totalorder %s68, %s71
    %p80 = scmp.eq.s32.totalorder %s25, 3
    %p81 = por %p79, %p80
    %p82 = scmp.ne.s32.totalorder %s71, %s72
    %p83 = scmp.eq.s32.totalorder %s25, 0
    %p84 = por %p82, %p83
    %p85 = scmp.ne.s32.totalorder %s71, %s72
    %p86 = scmp.eq.s32.totalorder %s26, 3
    %p87 = por %p85, %p86
    %p89 = scmp.ne.s32.totalorder %s72, %s88
    %p90 = scmp.eq.s32.totalorder %s26, 0
    %p91 = por %p89, %p90
    %s92 = ssub.s32 %s28, %s35
    %p93 = scmp.eq.s32.totalorder %s92, 0
    %s95 = sadd.s32 %s94, 1
    %s96 = scalar_select %p93, %s94, %s95
    %p99 = pneg %p93
    %p100 = scmp.eq.s32.totalorder %s20, 3
    %p101 = por %p99, %p100
    %p102 = scmp.ne.s32.totalorder %s94, %s97
    %p103 = scmp.eq.s32.totalorder %s20, 0
    %p104 = por %p102, %p103
    %p105 = scmp.ne.s32.totalorder %s94, %s97
    %p106 = scmp.eq.s32.totalorder %s25, 3
    %p107 = por %p105, %p106
    %p108 = scmp.ne.s32.totalorder %s97, %s98
    %p109 = scmp.eq.s32.totalorder %s25, 0
    %p110 = por %p108, %p109
    %p111 = scmp.ne.s32.totalorder %s97, %s98
    %p112 = scmp.eq.s32.totalorder %s26, 3
    %p113 = por %p111, %p112
    %p115 = scmp.ne.s32.totalorder %s98, %s114
    %p116 = scmp.eq.s32.totalorder %s26, 0
    %p117 = por %p115, %p116
    %s118 = ssub.s32 %s28, %s35
    %p119 = scmp.eq.s32.totalorder %s118, 0
    %s121 = sadd.s32 %s120, 1
    %s122 = scalar_select %p119, %s120, %s121
    %p125 = pneg %p119
    %p126 = scmp.eq.s32.totalorder %s20, 3
    %p127 = por %p125, %p126
    %p128 = scmp.ne.s32.totalorder %s120, %s123
    %p129 = scmp.eq.s32.totalorder %s20, 0
    %p130 = por %p128, %p129
    %p131 = scmp.ne.s32.totalorder %s120, %s123
    %p132 = scmp.eq.s32.totalorder %s25, 3
    %p133 = por %p131, %p132
    %p134 = scmp.ne.s32.totalorder %s123, %s124
    %p135 = scmp.eq.s32.totalorder %s25, 0
    %p136 = por %p134, %p135
    %p137 = scmp.ne.s32.totalorder %s123, %s124
    %p138 = scmp.eq.s32.totalorder %s26, 3
    %p139 = por %p137, %p138
    %p141 = scmp.ne.s32.totalorder %s124, %s140
    %p142 = scmp.eq.s32.totalorder %s26, 0
    %p143 = por %p141, %p142
    %s144 = ssub.s32 %s28, %s35
    %p145 = scmp.eq.s32.totalorder %s144, 0
    %s147 = sadd.s32 %s146, 1
    %s148 = scalar_select %p145, %s146, %s147
    %p151 = pneg %p145
    %p152 = scmp.eq.s32.totalorder %s20, 3
    %p153 = por %p151, %p152
    %p154 = scmp.ne.s32.totalorder %s146, %s149
    %p155 = scmp.eq.s32.totalorder %s20, 0
    %p156 = por %p154, %p155
    %p157 = scmp.ne.s32.totalorder %s146, %s149
    %p158 = scmp.eq.s32.totalorder %s25, 3
    %p159 = por %p157, %p158
    %p160 = scmp.ne.s32.totalorder %s149, %s150
    %p161 = scmp.eq.s32.totalorder %s25, 0
    %p162 = por %p160, %p161
    %p163 = scmp.ne.s32.totalorder %s149, %s150
    %p164 = scmp.eq.s32.totalorder %s26, 3
    %p165 = por %p163, %p164
    %p167 = scmp.ne.s32.totalorder %s150, %s166
    %p168 = scmp.eq.s32.totalorder %s26, 0
    %p169 = por %p167, %p168
    %s170 = ssub.s32 %s28, %s35
    %p171 = scmp.eq.s32.totalorder %s170, 0
    %s173 = sadd.s32 %s172, 1
    %s174 = scalar_select %p171, %s172, %s173
    %p177 = pneg %p171
    %p178 = scmp.eq.s32.totalorder %s20, 3
    %p179 = por %p177, %p178
    %p180 = scmp.ne.s32.totalorder %s172, %s175
    %p181 = scmp.eq.s32.totalorder %s20, 0
    %p182 = por %p180, %p181
    %p183 = scmp.ne.s32.totalorder %s172, %s175
    %p184 = scmp.eq.s32.totalorder %s25, 3
    %p185 = por %p183, %p184
    %p186 = scmp.ne.s32.totalorder %s175, %s176
    %p187 = scmp.eq.s32.totalorder %s25, 0
    %p188 = por %p186, %p187
    %p189 = scmp.ne.s32.totalorder %s175, %s176
    %p190 = scmp.eq.s32.totalorder %s26, 3
    %p191 = por %p189, %p190
    %p193 = scmp.ne.s32.totalorder %s176, %s192
    %p194 = scmp.eq.s32.totalorder %s26, 0
    %p195 = por %p193, %p194
    %s196 = ssub.s32 %s28, %s35
    %p197 = scmp.eq.s32.totalorder %s196, 0
    %s199 = sadd.s32 %s198, 1
    %s200 = scalar_select %p197, %s198, %s199
    %p203 = pneg %p197
    %p204 = scmp.eq.s32.totalorder %s20, 3
    %p205 = por %p203, %p204
    %p206 = scmp.ne.s32.totalorder %s198, %s201
    %p207 = scmp.eq.s32.totalorder %s20, 0
    %p208 = por %p206, %p207
    %p209 = scmp.ne.s32.totalorder %s198, %s201
    %p210 = scmp.eq.s32.totalorder %s25, 3
    %p211 = por %p209, %p210
    %p212 = scmp.ne.s32.totalorder %s201, %s202
    %p213 = scmp.eq.s32.totalorder %s25, 0
    %p214 = por %p212, %p213
    %p215 = scmp.ne.s32.totalorder %s201, %s202
    %p216 = scmp.eq.s32.totalorder %s26, 3
    %p217 = por %p215, %p216
    %p219 = scmp.ne.s32.totalorder %s202, %s218
    %p220 = scmp.eq.s32.totalorder %s26, 0
    %p221 = por %p219, %p220
    %s222 = ssub.s32 %s28, %s35
    %p223 = scmp.eq.s32.totalorder %s222, 0
    %s225 = sadd.s32 %s224, 1
    %s226 = scalar_select %p223, %s224, %s225
    %p229 = pneg %p223
    %p230 = scmp.eq.s32.totalorder %s20, 3
    %p231 = por %p229, %p230
    %p232 = scmp.ne.s32.totalorder %s224, %s227
    %p233 = scmp.eq.s32.totalorder %s20, 0
    %p234 = por %p232, %p233
    %p235 = scmp.ne.s32.totalorder %s224, %s227
    %p236 = scmp.eq.s32.totalorder %s25, 3
    %p237 = por %p235, %p236
    %p238 = scmp.ne.s32.totalorder %s227, %s228
    %p239 = scmp.eq.s32.totalorder %s25, 0
    %p240 = por %p238, %p239
    %p241 = scmp.ne.s32.totalorder %s227, %s228
    %p242 = scmp.eq.s32.totalorder %s26, 3
    %p243 = por %p241, %p242
    %p245 = scmp.ne.s32.totalorder %s228, %s244
    %p246 = scmp.eq.s32.totalorder %s26, 0
    %p247 = por %p245, %p246
    %s248 = ssub.s32 %s28, %s35
    %p249 = scmp.eq.s32.totalorder %s248, 0
    %s251 = sadd.s32 %s250, 1
    %s252 = scalar_select %p249, %s250, %s251
    %p255 = pneg %p249
    %p256 = scmp.eq.s32.totalorder %s20, 3
    %p257 = por %p255, %p256
    %p258 = scmp.ne.s32.totalorder %s250, %s253
    %p259 = scmp.eq.s32.totalorder %s20, 0
    %p260 = por %p258, %p259
    %p261 = scmp.ne.s32.totalorder %s250, %s253
    %p262 = scmp.eq.s32.totalorder %s25, 3
    %p263 = por %p261, %p262
    %p264 = scmp.ne.s32.totalorder %s253, %s254
    %p265 = scmp.eq.s32.totalorder %s25, 0
    %p266 = por %p264, %p265
    %p267 = scmp.ne.s32.totalorder %s253, %s254
    %p268 = scmp.eq.s32.totalorder %s26, 3
    %p269 = por %p267, %p268
    %p271 = scmp.ne.s32.totalorder %s254, %s270
    %p272 = scmp.eq.s32.totalorder %s26, 0
    %p273 = por %p271, %p272
    %s274 = ssub.s32 %s28, %s35
    %p275 = scmp.eq.s32.totalorder %s274, 0
    %s277 = sadd.s32 %s276, 1
    %s278 = scalar_select %p275, %s276, %s277
    %p281 = pneg %p275
    %p282 = scmp.eq.s32.totalorder %s20, 3
    %p283 = por %p281, %p282
    %p284 = scmp.ne.s32.totalorder %s276, %s279
    %p285 = scmp.eq.s32.totalorder %s20, 0
    %p286 = por %p284, %p285
    %p287 = scmp.ne.s32.totalorder %s276, %s279
    %p288 = scmp.eq.s32.totalorder %s25, 3
    %p289 = por %p287, %p288
    %p290 = scmp.ne.s32.totalorder %s279, %s280
    %p291 = scmp.eq.s32.totalorder %s25, 0
    %p292 = por %p290, %p291
    %p293 = scmp.ne.s32.totalorder %s279, %s280
    %p294 = scmp.eq.s32.totalorder %s26, 3
    %p295 = por %p293, %p294
    %p297 = scmp.ne.s32.totalorder %s280, %s296
    %p298 = scmp.eq.s32.totalorder %s26, 0
    %p299 = por %p297, %p298
    %s300 = ssub.s32 %s28, %s35
    %p301 = scmp.eq.s32.totalorder %s300, 0
    %s303 = sadd.s32 %s302, 1
    %s304 = scalar_select %p301, %s302, %s303
    %p307 = pneg %p301
    %p308 = scmp.eq.s32.totalorder %s20, 3
    %p309 = por %p307, %p308
    %p310 = scmp.ne.s32.totalorder %s302, %s305
    %p311 = scmp.eq.s32.totalorder %s20, 0
    %p312 = por %p310, %p311
    %p313 = scmp.ne.s32.totalorder %s302, %s305
    %p314 = scmp.eq.s32.totalorder %s25, 3
    %p315 = por %p313, %p314
    %p316 = scmp.ne.s32.totalorder %s305, %s306
    %p317 = scmp.eq.s32.totalorder %s25, 0
    %p318 = por %p316, %p317
    %p319 = scmp.ne.s32.totalorder %s305, %s306
    %p320 = scmp.eq.s32.totalorder %s26, 3
    %p321 = por %p319, %p320
    %p323 = scmp.ne.s32.totalorder %s306, %s322
    %p324 = scmp.eq.s32.totalorder %s26, 0
    %p325 = por %p323, %p324
    %s326 = ssub.s32 %s28, %s35
    %p327 = scmp.eq.s32.totalorder %s326, 0
    %s329 = sadd.s32 %s328, 1
    %s330 = scalar_select %p327, %s328, %s329
    %p333 = pneg %p327
    %p334 = scmp.eq.s32.totalorder %s20, 3
    %p335 = por %p333, %p334
    %p336 = scmp.ne.s32.totalorder %s328, %s331
    %p337 = scmp.eq.s32.totalorder %s20, 0
    %p338 = por %p336, %p337
    %p339 = scmp.ne.s32.totalorder %s328, %s331
    %p340 = scmp.eq.s32.totalorder %s25, 3
    %p341 = por %p339, %p340
    %p342 = scmp.ne.s32.totalorder %s331, %s332
    %p343 = scmp.eq.s32.totalorder %s25, 0
    %p344 = por %p342, %p343
    %p345 = scmp.ne.s32.totalorder %s331, %s332
    %p346 = scmp.eq.s32.totalorder %s26, 3
    %p347 = por %p345, %p346
    %p349 = scmp.ne.s32.totalorder %s332, %s348
    %p350 = scmp.eq.s32.totalorder %s26, 0
    %p351 = por %p349, %p350
    %s352 = ssub.s32 %s28, %s35
    %p353 = scmp.eq.s32.totalorder %s352, 0
    %s355 = sadd.s32 %s354, 1
    %s356 = scalar_select %p353, %s354, %s355
    %p359 = pneg %p353
    %p360 = scmp.eq.s32.totalorder %s20, 3
    %p361 = por %p359, %p360
    %p362 = scmp.ne.s32.totalorder %s354, %s357
    %p363 = scmp.eq.s32.totalorder %s20, 0
    %p364 = por %p362, %p363
    %p365 = scmp.ne.s32.totalorder %s354, %s357
    %p366 = scmp.eq.s32.totalorder %s25, 3
    %p367 = por %p365, %p366
    %p368 = scmp.ne.s32.totalorder %s357, %s358
    %p369 = scmp.eq.s32.totalorder %s25, 0
    %p370 = por %p368, %p369
    %p371 = scmp.ne.s32.totalorder %s357, %s358
    %p372 = scmp.eq.s32.totalorder %s26, 3
    %p373 = por %p371, %p372
    %p375 = scmp.ne.s32.totalorder %s358, %s374
    %p376 = scmp.eq.s32.totalorder %s26, 0
    %p377 = por %p375, %p376
    %s378 = ssub.s32 %s28, %s35
    %p379 = scmp.eq.s32.totalorder %s378, 0
    %s381 = sadd.s32 %s380, 1
    %s382 = scalar_select %p379, %s380, %s381
    %p385 = pneg %p379
    %p386 = scmp.eq.s32.totalorder %s20, 3
    %p387 = por %p385, %p386
    %p388 = scmp.ne.s32.totalorder %s380, %s383
    %p389 = scmp.eq.s32.totalorder %s20, 0
    %p390 = por %p388, %p389
    %p391 = scmp.ne.s32.totalorder %s380, %s383
    %p392 = scmp.eq.s32.totalorder %s25, 3
    %p393 = por %p391, %p392
    %p394 = scmp.ne.s32.totalorder %s383, %s384
    %p395 = scmp.eq.s32.totalorder %s25, 0
    %p396 = por %p394, %p395
    %p397 = scmp.ne.s32.totalorder %s383, %s384
    %p398 = scmp.eq.s32.totalorder %s26, 3
    %p399 = por %p397, %p398
    %p401 = scmp.ne.s32.totalorder %s384, %s400
    %p402 = scmp.eq.s32.totalorder %s26, 0
    %p403 = por %p401, %p402
    %s404 = ssub.s32 %s27, %s39
    %p405 = scmp.eq.s32.totalorder %s404, 0
    %s407 = sadd.s32 %s406, 1
    %s408 = scalar_select %p405, %s406, %s407
    %p411 = pneg %p405
    %p412 = scmp.eq.s32.totalorder %s20, 3
    %p413 = por %p411, %p412
    %p414 = scmp.ne.s32.totalorder %s406, %s409
    %p415 = scmp.eq.s32.totalorder %s20, 0
    %p416 = por %p414, %p415
    %p417 = scmp.ne.s32.totalorder %s406, %s409
    %p418 = scmp.eq.s32.totalorder %s25, 3
    %p419 = por %p417, %p418
    %p420 = scmp.ne.s32.totalorder %s409, %s410
    %p421 = scmp.eq.s32.totalorder %s25, 0
    %p422 = por %p420, %p421
    %p423 = scmp.ne.s32.totalorder %s409, %s410
    %p424 = scmp.eq.s32.totalorder %s26, 3
    %p425 = por %p423, %p424
    %p427 = scmp.ne.s32.totalorder %s410, %s426
    %p428 = scmp.eq.s32.totalorder %s26, 0
    %p429 = por %p427, %p428
    %p430 = scmp.le.s32.totalorder 1, %s20
    %p431 = scmp.lt.s32.totalorder %s20, 5
    %p432 = pnand %p430, %p431
    %p433 = pneg %p432
    // Predicated region
    $region9: #{forward.3} parent=5 // pred_check
      _
    $region10: #{forward.3} parent=5 // pred_check_branch
      %435 = sbr.rel (%p432) target = $region12
    $region11: #{forward.3} parent=5 // pred_region
      %s436 = ssub.s32 %s20, 1
    $region12: #{forward.3} parent=5 // pred_fallthru
      _
    %p437 = scmp.lt.s32.totalorder %s20, 4
    // Predicated region
    $region13: #{forward.3} parent=5 // pred_check
      %p438 = pneg %p437
    $region14: #{forward.3} parent=5 // pred_check_branch
      %440 = sbr.rel (%p438) target = $region16
    $region15: #{forward.3} parent=5 // pred_region
      // Predicated region
      $region17: #{forward.3} parent=15 // pred_check
        %p441 = pneg %p52
      $region18: #{forward.3} parent=15 // pred_check_branch
        %443 = sbr.rel (%p441) target = $region20
      $region19: #{forward.3} parent=15 // pred_region
        %p444 = scmp.lt.s32.totalorder %s27, 1
        %s445 = scalar_select %p444, %s27, 1
        %s446 = smul.addr %s445, 2
        %s447 = smul.addr %s446, 8
        %s448 = scalar_lea.vmem %s0, %s447
      $region20: #{forward.3} parent=15 // pred_fallthru
        _
      // Predicated region
      $region21: #{forward.3} parent=15 // pred_check
        %p449 = pneg %p78
      $region22: #{forward.3} parent=15 // pred_check_branch
        %451 = sbr.rel (%p449) target = $region24
      $region23: #{forward.3} parent=15 // pred_region
        %p452 = scmp.lt.s32.totalorder %s27, 1
        %s453 = scalar_select %p452, %s27, 1
        %s454 = scalar_lea.vmem %s1, %s453
      $region24: #{forward.3} parent=15 // pred_fallthru
        _
      // Predicated region
      $region25: #{forward.3} parent=15 // pred_check
        %p455 = pneg %p104
      $region26: #{forward.3} parent=15 // pred_check_branch
        %457 = sbr.rel (%p455) target = $region28
      $region27: #{forward.3} parent=15 // pred_region
        %p458 = scmp.lt.s32.totalorder %s28, 1
        %s459 = scalar_select %p458, %s28, 1
        %s460 = smul.addr %s459, 48
        %s461 = smul.addr %s460, 4
        %s462 = scalar_lea.vmem %s2, %s461
      $region28: #{forward.3} parent=15 // pred_fallthru
        _
      // Predicated region
      $region29: #{forward.3} parent=15 // pred_check
        %p463 = pneg %p130
      $region30: #{forward.3} parent=15 // pred_check_branch
        %465 = sbr.rel (%p463) target = $region32
      $region31: #{forward.3} parent=15 // pred_region
        %p466 = scmp.lt.s32.totalorder %s28, 1
        %s467 = scalar_select %p466, %s28, 1
        %s468 = smul.addr %s467, 3
        %s469 = scalar_lea.vmem %s3, %s468
      $region32: #{forward.3} parent=15 // pred_fallthru
        _
      // Predicated region
      $region33: #{forward.3} parent=15 // pred_check
        %p470 = pneg %p156
      $region34: #{forward.3} parent=15 // pred_check_branch
        %472 = sbr.rel (%p470) target = $region36
      $region35: #{forward.3} parent=15 // pred_region
        %p473 = scmp.lt.s32.totalorder %s28, 1
        %s474 = scalar_select %p473, %s28, 1
        %s475 = smul.addr %s474, 16
        %s476 = smul.addr %s475, 4
        %s477 = scalar_lea.vmem %s4, %s476
      $region36: #{forward.3} parent=15 // pred_fallthru
        _
      // Predicated region
      $region37: #{forward.3} parent=15 // pred_check
        %p478 = pneg %p182
      $region38: #{forward.3} parent=15 // pred_check_branch
        %480 = sbr.rel (%p478) target = $region40
      $region39: #{forward.3} parent=15 // pred_region
        %p481 = scmp.lt.s32.totalorder %s28, 1
        %s482 = scalar_select %p481, %s28, 1
        %s483 = scalar_lea.vmem %s5, %s482
      $region40: #{forward.3} parent=15 // pred_fallthru
        _
      // Predicated region
      $region41: #{forward.3} parent=15 // pred_check
        %p484 = pneg %p208
      $region42: #{forward.3} parent=15 // pred_check_branch
        %486 = sbr.rel (%p484) target = $region44
      $region43: #{forward.3} parent=15 // pred_region
        %p487 = scmp.lt.s32.totalorder %s28, 1
        %s488 = scalar_select %p487, %s28, 1
        %s489 = smul.addr %s488, 16
        %s490 = smul.addr %s489, 4
        %s491 = scalar_lea.vmem %s6, %s490
      $region44: #{forward.3} parent=15 // pred_fallthru
        _
      // Predicated region
      $region45: #{forward.3} parent=15 // pred_check
        %p492 = pneg %p234
      $region46: #{forward.3} parent=15 // pred_check_branch
        %494 = sbr.rel (%p492) target = $region48
      $region47: #{forward.3} parent=15 // pred_region
        %p495 = scmp.lt.s32.totalorder %s28, 1
        %s496 = scalar_select %p495, %s28, 1
        %s497 = scalar_lea.vmem %s7, %s496
      $region48: #{forward.3} parent=15 // pred_fallthru
        _
      // Predicated region
      $region49: #{forward.3} parent=15 // pred_check
        %p498 = pneg %p260
      $region50: #{forward.3} parent=15 // pred_check_branch
        %500 = sbr.rel (%p498) target = $region52
      $region51: #{forward.3} parent=15 // pred_region
        %p501 = scmp.lt.s32.totalorder %s28, 1
        %s502 = scalar_select %p501, %s28, 1
        %s503 = smul.addr %s502, 16
        %s504 = smul.addr %s503, 4
        %s505 = scalar_lea.vmem %s8, %s504
      $region52: #{forward.3} parent=15 // pred_fallthru
        _
      // Predicated region
      $region53: #{forward.3} parent=15 // pred_check
        %p506 = pneg %p286
      $region54: #{forward.3} parent=15 // pred_check_branch
        %508 = sbr.rel (%p506) target = $region56
      $region55: #{forward.3} parent=15 // pred_region
        %p509 = scmp.lt.s32.totalorder %s28, 1
        %s510 = scalar_select %p509, %s28, 1
        %s511 = scalar_lea.vmem %s9, %s510
      $region56: #{forward.3} parent=15 // pred_fallthru
        _
      // Predicated region
      $region57: #{forward.3} parent=15 // pred_check
        %p512 = pneg %p312
      $region58: #{forward.3} parent=15 // pred_check_branch
        %514 = sbr.rel (%p512) target = $region60
      $region59: #{forward.3} parent=15 // pred_region
        %p515 = scmp.lt.s32.totalorder %s28, 1
        %s516 = scalar_select %p515, %s28, 1
        %s517 = scalar_lea.vmem %s10, %s516
      $region60: #{forward.3} parent=15 // pred_fallthru
        _
      // Predicated region
      $region61: #{forward.3} parent=15 // pred_check
        %p518 = pneg %p338
      $region62: #{forward.3} parent=15 // pred_check_branch
        %520 = sbr.rel (%p518) target = $region64
      $region63: #{forward.3} parent=15 // pred_region
        %p521 = scmp.lt.s32.totalorder %s28, 1
        %s522 = scalar_select %p521, %s28, 1
        %s523 = scalar_lea.vmem %s11, %s522
      $region64: #{forward.3} parent=15 // pred_fallthru
        _
      // Predicated region
      $region65: #{forward.3} parent=15 // pred_check
        %p524 = pneg %p364
      $region66: #{forward.3} parent=15 // pred_check_branch
        %526 = sbr.rel (%p524) target = $region68
      $region67: #{forward.3} parent=15 // pred_region
        %p527 = scmp.lt.s32.totalorder %s28, 1
        %s528 = scalar_select %p527, %s28, 1
        %s529 = scalar_lea.vmem %s12, %s528
      $region68: #{forward.3} parent=15 // pred_fallthru
        _
      // Predicated region
      $region69: #{forward.3} parent=15 // pred_check
        %p530 = pneg %p390
      $region70: #{forward.3} parent=15 // pred_check_branch
        %532 = sbr.rel (%p530) target = $region72
      $region71: #{forward.3} parent=15 // pred_region
        %p533 = scmp.lt.s32.totalorder %s28, 1
        %s534 = scalar_select %p533, %s28, 1
        %s535 = scalar_lea.vmem %s13, %s534
      $region72: #{forward.3} parent=15 // pred_fallthru
        _
    $region16: #{forward.3} parent=5 // pred_fallthru
      _
    %p536 = scmp.le.s32.totalorder 1, %s20
    %p537 = scmp.lt.s32.totalorder %s20, 5
    %p538 = pnand %p536, %p537
    %p539 = pneg %p538
    // Predicated region
    $region73: #{forward.3} parent=5 // pred_check
      _
    $region74: #{forward.3} parent=5 // pred_check_branch
      %541 = sbr.rel (%p538) target = $region76
    $region75: #{forward.3} parent=5 // pred_region
      %s542 = ssub.s32 %s20, 1
      %p543 = scmp.lt.s32.totalorder %s29, 1
      %s544 = scalar_select %p543, %s29, 1
      %s545 = smul.addr %s544, 2
      %s546 = smul.addr %s545, 8
      %s547 = scalar_lea.vmem %s0, %s546
      %p548 = pneg %p58
      %p549 = pneg %p55
      %p550 = scmp.lt.s32.totalorder %s29, 1
      %s551 = scalar_select %p550, %s29, 1
      %s552 = scalar_lea.vmem %s1, %s551
      %p553 = pneg %p84
      %p554 = pneg %p81
      %p555 = scmp.lt.s32.totalorder %s30, 1
      %s556 = scalar_select %p555, %s30, 1
      %s557 = smul.addr %s556, 48
      %s558 = smul.addr %s557, 4
      %s559 = scalar_lea.vmem %s2, %s558
      %p560 = pneg %p110
      %p561 = pneg %p107
      %p562 = scmp.lt.s32.totalorder %s30, 1
      %s563 = scalar_select %p562, %s30, 1
      %s564 = smul.addr %s563, 3
      %s565 = scalar_lea.vmem %s3, %s564
      %p566 = pneg %p136
      %p567 = pneg %p133
      %p568 = scmp.lt.s32.totalorder %s30, 1
      %s569 = scalar_select %p568, %s30, 1
      %s570 = smul.addr %s569, 16
      %s571 = smul.addr %s570, 4
      %s572 = scalar_lea.vmem %s4, %s571
      %p573 = pneg %p162
      %p574 = pneg %p159
      %p575 = scmp.lt.s32.totalorder %s30, 1
      %s576 = scalar_select %p575, %s30, 1
      %s577 = scalar_lea.vmem %s5, %s576
      %p578 = pneg %p188
      %p579 = pneg %p185
      %p580 = scmp.lt.s32.totalorder %s30, 1
      %s581 = scalar_select %p580, %s30, 1
      %s582 = smul.addr %s581, 16
      %s583 = smul.addr %s582, 4
      %s584 = scalar_lea.vmem %s6, %s583
      %p585 = pneg %p214
      %p586 = pneg %p211
      %p587 = scmp.lt.s32.totalorder %s30, 1
      %s588 = scalar_select %p587, %s30, 1
      %s589 = scalar_lea.vmem %s7, %s588
      %p590 = pneg %p240
      %p591 = pneg %p237
      %p592 = scmp.lt.s32.totalorder %s30, 1
      %s593 = scalar_select %p592, %s30, 1
      %s594 = smul.addr %s593, 16
      %s595 = smul.addr %s594, 4
      %s596 = scalar_lea.vmem %s8, %s595
      %p597 = pneg %p266
      %p598 = pneg %p263
      %p599 = scmp.lt.s32.totalorder %s30, 1
      %s600 = scalar_select %p599, %s30, 1
      %s601 = scalar_lea.vmem %s9, %s600
      %p602 = pneg %p292
      %p603 = pneg %p289
      %p604 = scmp.lt.s32.totalorder %s30, 1
      %s605 = scalar_select %p604, %s30, 1
      %s606 = scalar_lea.vmem %s10, %s605
      %p607 = pneg %p318
      %p608 = pneg %p315
      %p609 = scmp.lt.s32.totalorder %s30, 1
      %s610 = scalar_select %p609, %s30, 1
      %s611 = scalar_lea.vmem %s11, %s610
      %p612 = pneg %p344
      %p613 = pneg %p341
      %p614 = scmp.lt.s32.totalorder %s30, 1
      %s615 = scalar_select %p614, %s30, 1
      %s616 = scalar_lea.vmem %s12, %s615
      %p617 = pneg %p370
      %p618 = pneg %p367
      %p619 = scmp.lt.s32.totalorder %s30, 1
      %s620 = scalar_select %p619, %s30, 1
      %s621 = scalar_lea.vmem %s13, %s620
      %p622 = pneg %p396
      %p623 = pneg %p393
      %p624 = pneg %p422
      %p625 = pneg %p419
      %p626 = scmp.lt.s32.totalorder %s29, 1
      %s627 = scalar_select %p626, %s29, 1
      %s628 = smul.addr %s627, 2
      %s629 = smul.addr %s628, 8
      %s630 = scalar_lea.vmem %s14, %s629
      %p631 = scmp.lt.s32.totalorder %s29, 1
      %s632 = scalar_select %p631, %s29, 1
      %s633 = smul.addr %s632, 2
      %s634 = smul.addr %s633, 8
      %s635 = scalar_lea.vmem %s0, %s634
      %p636 = scmp.lt.s32.totalorder %s29, 1
      %s637 = scalar_select %p636, %s29, 1
      %s638 = scalar_lea.vmem %s1, %s637
      %p639 = scmp.lt.s32.totalorder %s30, 1
      %s640 = scalar_select %p639, %s30, 1
      %s641 = smul.addr %s640, 48
      %s642 = smul.addr %s641, 4
      %s643 = scalar_lea.vmem %s2, %s642
      %p644 = scmp.lt.s32.totalorder %s30, 1
      %s645 = scalar_select %p644, %s30, 1
      %s646 = smul.addr %s645, 3
      %s647 = scalar_lea.vmem %s3, %s646
      %p648 = scmp.lt.s32.totalorder %s30, 1
      %s649 = scalar_select %p648, %s30, 1
      %s650 = smul.addr %s649, 16
      %s651 = smul.addr %s650, 4
      %s652 = scalar_lea.vmem %s4, %s651
      %p653 = scmp.lt.s32.totalorder %s30, 1
      %s654 = scalar_select %p653, %s30, 1
      %s655 = scalar_lea.vmem %s5, %s654
      %p656 = scmp.lt.s32.totalorder %s30, 1
      %s657 = scalar_select %p656, %s30, 1
      %s658 = smul.addr %s657, 16
      %s659 = smul.addr %s658, 4
      %s660 = scalar_lea.vmem %s6, %s659
      %p661 = scmp.lt.s32.totalorder %s30, 1
      %s662 = scalar_select %p661, %s30, 1
      %s663 = scalar_lea.vmem %s7, %s662
      %p664 = scmp.lt.s32.totalorder %s30, 1
      %s665 = scalar_select %p664, %s30, 1
      %s666 = smul.addr %s665, 16
      %s667 = smul.addr %s666, 4
      %s668 = scalar_lea.vmem %s8, %s667
      %p669 = scmp.lt.s32.totalorder %s30, 1
      %s670 = scalar_select %p669, %s30, 1
      %s671 = scalar_lea.vmem %s9, %s670
      %p672 = scmp.lt.s32.totalorder %s30, 1
      %s673 = scalar_select %p672, %s30, 1
      %s674 = scalar_lea.vmem %s10, %s673
      %p675 = scmp.lt.s32.totalorder %s30, 1
      %s676 = scalar_select %p675, %s30, 1
      %s677 = scalar_lea.vmem %s11, %s676
      %p678 = scmp.lt.s32.totalorder %s30, 1
      %s679 = scalar_select %p678, %s30, 1
      %s680 = scalar_lea.vmem %s12, %s679
      %p681 = scmp.lt.s32.totalorder %s30, 1
      %s682 = scalar_select %p681, %s30, 1
      %s683 = scalar_lea.vmem %s13, %s682
      %p684 = scmp.lt.s32.totalorder %s29, 1
      %s685 = scalar_select %p684, %s29, 1
      %s686 = smul.addr %s685, 2
      %s687 = smul.addr %s686, 8
      %s688 = scalar_lea.vmem %s14, %s687
      %p690 = scmp.eq.s32.totalorder %s30, 0
      // Predicated region
      $region77: #{forward.3} parent=75 // pred_check
        %p691 = pneg %p690
      $region78: #{forward.3} parent=75 // pred_check_branch
        %693 = sbr.rel (%p691) target = $region80
      $region79: #{forward.3} parent=75 // pred_region
        %v694 = vld [vmem:[%s635] sm:$0xff]
        %v695 = vld [vmem:[%s635 + $0x8] sm:$0x1]
        %696 = vst [vmem:[#allocation2] sm:$0xff] %v694
        %697 = vst [vmem:[#allocation2 + $0x8] sm:$0x1] %v695
      $region80: #{forward.3} parent=75 // pred_fallthru
        _
      %v698 = vld [vmem:[#allocation2] sm:$0xff]
      %v699 = vld [vmem:[#allocation2 + $0x8] sm:$0x1]
      %v700 = vld [vmem:[%s638] sm:$0x1]
      %v702 = vperm.slane %v700, 0
      %v704 = vld [vmem:[%s643] sm:$0xf]
      %v705 = vld [vmem:[%s643 + $0x4] sm:$0xf]
      %v706 = vld [vmem:[%s643 + $0x8] sm:$0xf]
      %v707 = vld [vmem:[%s643 + $0xc] sm:$0xf]
      %v708 = vld [vmem:[%s643 + $0x10] sm:$0xf]
      %v709 = vld [vmem:[%s643 + $0x14] sm:$0xf]
      %v710 = vld [vmem:[%s643 + $0x18] sm:$0xf]
      %v711 = vld [vmem:[%s643 + $0x1c] sm:$0xf]
      %v712 = vld [vmem:[%s643 + $0x20] sm:$0xf]
      %v713 = vld [vmem:[%s643 + $0x24] sm:$0xf]
      %v714 = vld [vmem:[%s643 + $0x28] sm:$0xf]
      %v715 = vld [vmem:[%s643 + $0x2c] sm:$0xf]
      %v716 = vld [vmem:[%s643 + $0x30] sm:$0xf]
      %v717 = vld [vmem:[%s643 + $0x34] sm:$0xf]
      %v718 = vld [vmem:[%s643 + $0x38] sm:$0xf]
      %v719 = vld [vmem:[%s643 + $0x3c] sm:$0xf]
      %v720 = vld [vmem:[%s643 + $0x40] sm:$0xf]
      %v721 = vld [vmem:[%s643 + $0x44] sm:$0xf]
      %v722 = vld [vmem:[%s643 + $0x48] sm:$0xf]
      %v723 = vld [vmem:[%s643 + $0x4c] sm:$0xf]
      %v724 = vld [vmem:[%s643 + $0x50] sm:$0xf]
      %v725 = vld [vmem:[%s643 + $0x54] sm:$0xf]
      %v726 = vld [vmem:[%s643 + $0x58] sm:$0xf]
      %v727 = vld [vmem:[%s643 + $0x5c] sm:$0xf]
      %v728 = vld [vmem:[%s643 + $0x60] sm:$0xf]
      %v729 = vld [vmem:[%s643 + $0x64] sm:$0xf]
      %v730 = vld [vmem:[%s643 + $0x68] sm:$0xf]
      %v731 = vld [vmem:[%s643 + $0x6c] sm:$0xf]
      %v732 = vld [vmem:[%s643 + $0x70] sm:$0xf]
      %v733 = vld [vmem:[%s643 + $0x74] sm:$0xf]
      %v734 = vld [vmem:[%s643 + $0x78] sm:$0xf]
      %v735 = vld [vmem:[%s643 + $0x7c] sm:$0xf]
      %v736 = vld [vmem:[%s643 + $0x80] sm:$0xf]
      %v737 = vld [vmem:[%s643 + $0x84] sm:$0xf]
      %v738 = vld [vmem:[%s643 + $0x88] sm:$0xf]
      %v739 = vld [vmem:[%s643 + $0x8c] sm:$0xf]
      %v740 = vld [vmem:[%s643 + $0x90] sm:$0xf]
      %v741 = vld [vmem:[%s643 + $0x94] sm:$0xf]
      %v742 = vld [vmem:[%s643 + $0x98] sm:$0xf]
      %v743 = vld [vmem:[%s643 + $0x9c] sm:$0xf]
      %v744 = vld [vmem:[%s643 + $0xa0] sm:$0xf]
      %v745 = vld [vmem:[%s643 + $0xa4] sm:$0xf]
      %v746 = vld [vmem:[%s643 + $0xa8] sm:$0xf]
      %v747 = vld [vmem:[%s643 + $0xac] sm:$0xf]
      %v748 = vld [vmem:[%s643 + $0xb0] sm:$0xf]
      %v749 = vld [vmem:[%s643 + $0xb4] sm:$0xf]
      %v750 = vld [vmem:[%s643 + $0xb8] sm:$0xf]
      %v751 = vld [vmem:[%s643 + $0xbc] sm:$0xf]
      %v752 = vpack.c.bf16 %v699, %v698
      %v753 = vld [vmem:[%s647] sm:$0x7]
      %v755 = vperm.slane %v753, 0
      %v756 = vperm.slane %v753, 1
      %v757 = vperm.slane %v753, 2
      %v809 = vunpack.c.l.b16 %v704
      %v810 = vunpack.c.l.b16 %v705
      %v811 = vunpack.c.l.b16 %v706
      %v812 = vunpack.c.l.b16 %v707
      %v813 = vunpack.c.l.b16 %v708
      %v814 = vunpack.c.l.b16 %v709
      %v815 = vunpack.c.l.b16 %v710
      %v816 = vunpack.c.l.b16 %v711
      %v817 = vunpack.c.l.b16 %v712
      %v818 = vunpack.c.l.b16 %v713
      %v819 = vunpack.c.l.b16 %v714
      %v820 = vunpack.c.l.b16 %v715
      %v821 = vunpack.c.l.b16 %v716
      %v822 = vunpack.c.l.b16 %v717
      %v823 = vunpack.c.l.b16 %v718
      %v824 = vunpack.c.l.b16 %v719
      %v825 = vunpack.c.l.b16 %v720
      %v826 = vunpack.c.l.b16 %v721
      %v827 = vunpack.c.l.b16 %v722
      %v828 = vunpack.c.l.b16 %v723
      %v829 = vunpack.c.l.b16 %v724
      %v830 = vunpack.c.l.b16 %v725
      %v831 = vunpack.c.l.b16 %v726
      %v832 = vunpack.c.l.b16 %v727
      %v833 = vunpack.c.l.b16 %v728
      %v834 = vunpack.c.l.b16 %v729
      %v835 = vunpack.c.l.b16 %v730
      %v836 = vunpack.c.l.b16 %v731
      %v837 = vunpack.c.l.b16 %v732
      %v838 = vunpack.c.l.b16 %v733
      %v839 = vunpack.c.l.b16 %v734
      %v840 = vunpack.c.l.b16 %v735
      %v841 = vunpack.c.l.b16 %v736
      %v842 = vunpack.c.l.b16 %v737
      %v843 = vunpack.c.l.b16 %v738
      %v844 = vunpack.c.l.b16 %v739
      %v845 = vunpack.c.l.b16 %v740
      %v846 = vunpack.c.l.b16 %v741
      %v847 = vunpack.c.l.b16 %v742
      %v848 = vunpack.c.l.b16 %v743
      %v849 = vunpack.c.l.b16 %v744
      %v850 = vunpack.c.l.b16 %v745
      %v851 = vunpack.c.l.b16 %v746
      %v852 = vunpack.c.l.b16 %v747
      %v853 = vunpack.c.l.b16 %v748
      %v854 = vunpack.c.l.b16 %v749
      %v855 = vunpack.c.l.b16 %v750
      %v856 = vunpack.c.l.b16 %v751
      %v857 = vpack.c.b16 %v810, %v809
      %v858 = vpack.c.b16 %v812, %v811
      %v859 = vpack.c.b16 %v814, %v813
      %v860 = vpack.c.b16 %v816, %v815
      %v861 = vpack.c.b16 %v818, %v817
      %v862 = vpack.c.b16 %v820, %v819
      %v863 = vpack.c.b16 %v822, %v821
      %v864 = vpack.c.b16 %v824, %v823
      %v865 = vpack.c.b16 %v826, %v825
      %v866 = vpack.c.b16 %v828, %v827
      %v867 = vpack.c.b16 %v830, %v829
      %v868 = vpack.c.b16 %v832, %v831
      %v869 = vpack.c.b16 %v834, %v833
      %v870 = vpack.c.b16 %v836, %v835
      %v871 = vpack.c.b16 %v838, %v837
      %v872 = vpack.c.b16 %v840, %v839
      %v873 = vpack.c.b16 %v842, %v841
      %v874 = vpack.c.b16 %v844, %v843
      %v875 = vpack.c.b16 %v846, %v845
      %v876 = vpack.c.b16 %v848, %v847
      %v877 = vpack.c.b16 %v850, %v849
      %v878 = vpack.c.b16 %v852, %v851
      %v879 = vpack.c.b16 %v854, %v853
      %v880 = vpack.c.b16 %v856, %v855
      %905 = vmatpush.bf16.xpose.msra.mxu0 %v864
      %906 = vmatpush.bf16.xpose.msra.mxu0 %v863
      %907 = vmatpush.bf16.xpose.msra.mxu0 %v862
      %908 = vmatpush.bf16.xpose.msra.mxu0 %v861
      %909 = vmatpush.bf16.xpose.msra.mxu0 %v860
      %910 = vmatpush.bf16.xpose.msra.mxu0 %v859
      %911 = vmatpush.bf16.xpose.msra.mxu0 %v858
      %912 = vmatpush.bf16.xpose.msra.mxu0 %v857
      %913 = vmatmul.bf16.gmra.mxu0 %v752
      %v914 = vpop.f32.mrf.mxu0
      %v915 = vadd.f32 %v755, %v914
      %v916 = vpop.f32.mrf.mxu0
      %v917 = vadd.f32 %v755, %v916
      %918 = vdwg.mxu0
      %919 = vmatpush.bf16.xpose.msra.mxu0 %v872
      %920 = vmatpush.bf16.xpose.msra.mxu0 %v871
      %921 = vmatpush.bf16.xpose.msra.mxu0 %v870
      %922 = vmatpush.bf16.xpose.msra.mxu0 %v869
      %923 = vmatpush.bf16.xpose.msra.mxu0 %v868
      %924 = vmatpush.bf16.xpose.msra.mxu0 %v867
      %925 = vmatpush.bf16.xpose.msra.mxu0 %v866
      %926 = vmatpush.bf16.xpose.msra.mxu0 %v865
      %927 = vmatmul.bf16.gmra.mxu0 %v752
      %v928 = vpop.f32.mrf.mxu0
      %v929 = vadd.f32 %v756, %v928
      %v930 = vpop.f32.mrf.mxu0
      %v931 = vadd.f32 %v756, %v930
      %932 = vdwg.mxu0
      %933 = vmatpush.bf16.xpose.msra.mxu0 %v880
      %934 = vmatpush.bf16.xpose.msra.mxu0 %v879
      %935 = vmatpush.bf16.xpose.msra.mxu0 %v878
      %936 = vmatpush.bf16.xpose.msra.mxu0 %v877
      %937 = vmatpush.bf16.xpose.msra.mxu0 %v876
      %938 = vmatpush.bf16.xpose.msra.mxu0 %v875
      %939 = vmatpush.bf16.xpose.msra.mxu0 %v874
      %940 = vmatpush.bf16.xpose.msra.mxu0 %v873
      %941 = vmatmul.bf16.gmra.mxu0 %v752
      %v942 = vpop.f32.mrf.mxu0
      %v943 = vadd.f32 %v757, %v942
      %v944 = vpop.f32.mrf.mxu0
      %v945 = vadd.f32 %v757, %v944
      %946 = vdwg.mxu0
      %v947 = vpack.c.bf16 %v917, %v915
      %v948 = vpack.c.bf16 %v931, %v929
      %v949 = vpack.c.bf16 %v945, %v943
      %vm950 = vcmask 261120
      %v952 = vsel %vm950, %v947, 0
      %v955 = vsel %vm950, %v948, 0
      %957 = vmatpush.bf16.xpose.msra.mxu0 0
      %958 = vmatpush.bf16.xpose.msra.mxu0 0
      %959 = vmatpush.bf16.xpose.msra.mxu0 0
      %960 = vmatpush.bf16.xpose.msra.mxu0 0
      %961 = vmatpush.bf16.xpose.msra.mxu0 0
      %962 = vmatpush.bf16.xpose.msra.mxu0 0
      %963 = vmatpush.bf16.xpose.msra.mxu0 0
      %964 = vmatpush.bf16.xpose.msra.mxu0 %v955
      %965 = vmatmul.bf16.gmra.mxu0 %v952
      %v966 = vpop.f32.mrf.mxu0
      %v967 = vadd.f32 0.0, %v966
      %v968 = vpop.f32.mrf.mxu0
      %v969 = vadd.f32 0.0, %v968
      %970 = vdwg.mxu0
      %v971 = vmul.f32 %v967, 0.17677669
      %v972 = vmul.f32 %v969, 0.17677669
      %v973 = vadd.f32 %v971, %v702
      %v974 = vadd.f32 %v972, %v702
      %vm975 = vcmask 72704
      %v976 = vsel %vm975, %v973, -inf
      %977 = vmax.xlane.f32.xlu0 %v976
      %v978 = vpop.xlane.xlu0 %977
      %vm979 = vcmask 65536
      %v980 = vsel %vm979, %v974, -inf
      %981 = vmax.xlane.f32.xlu0 %v980
      %v982 = vpop.xlane.xlu0 %981
      %v983 = vsub.f32 %v973, %v978
      %v984 = vsub.f32 %v974, %v982
      %v985 = vmul.f32 %v983, 1.442695
      %v986 = vpow.pop %v985
      %v987 = vmul.f32 %v984, 1.442695
      %v988 = vpow.pop %v987
      %v989 = vsel %vm975, %v986, 0.0
      %990 = vadd.xlane.f32.xlu0 %v989
      %v991 = vpop.xlane.xlu0 %990
      %v992 = vsel %vm979, %v988, 0.0
      %993 = vadd.xlane.f32.xlu0 %v992
      %v994 = vpop.xlane.xlu0 %993
      %v995 = vrcp.pop %v991
      %v996 = vrcp.pop %v994
      %v997 = vmul.f32 %v986, %v995
      %v998 = vmul.f32 %v988, %v996
      %v999 = vpack.c.bf16 %v998, %v997
      %v1001 = vsel %vm975, %v999, 0
      %vm1003 = vcmask 1043456
      %vm1004 = vcmask 1044480
      %v1005 = vsel %vm1003, 4294967295, 65535
      %v1006 = vsel %vm1004, %v1005, 0
      %v1008 = vand.u32 %v949, %v1006
      %1010 = vmatpush.bf16.msra.mxu0 0
      %1011 = vmatpush.bf16.msra.mxu0 0
      %1012 = vmatpush.bf16.msra.mxu0 0
      %1013 = vmatpush.bf16.msra.mxu0 0
      %1014 = vmatpush.bf16.msra.mxu0 0
      %1015 = vmatpush.bf16.msra.mxu0 0
      %1016 = vmatpush.bf16.msra.mxu0 0
      %1017 = vmatpush.bf16.msra.mxu0 %v1008
      %1018 = vmatmul.bf16.gmra.mxu0 %v1001
      %v1019 = vpop.f32.mrf.mxu0
      %v1020 = vadd.f32 0.0, %v1019
      %v1021 = vpop.f32.mrf.mxu0
      %v1022 = vadd.f32 0.0, %v1021
      %1023 = vdwg.mxu0
      %1025 = vrot.lane.b32.xlu0 %v947, 96
      %v1026 = vpop.permute.xlu0 %1025
      %1028 = vrot.lane.b32.xlu0 %v948, 96
      %v1029 = vpop.permute.xlu0 %1028
      %v1031 = vsel %vm950, %v1026, 0
      %v1034 = vsel %vm950, %v1029, 0
      %1036 = vmatpush.bf16.xpose.msra.mxu0 0
      %1037 = vmatpush.bf16.xpose.msra.mxu0 0
      %1038 = vmatpush.bf16.xpose.msra.mxu0 0
      %1039 = vmatpush.bf16.xpose.msra.mxu0 0
      %1040 = vmatpush.bf16.xpose.msra.mxu0 0
      %1041 = vmatpush.bf16.xpose.msra.mxu0 0
      %1042 = vmatpush.bf16.xpose.msra.mxu0 0
      %1043 = vmatpush.bf16.xpose.msra.mxu0 %v1034
      %1044 = vmatmul.bf16.gmra.mxu0 %v1031
      %v1045 = vpop.f32.mrf.mxu0
      %v1046 = vadd.f32 0.0, %v1045
      %v1047 = vpop.f32.mrf.mxu0
      %v1048 = vadd.f32 0.0, %v1047
      %1049 = vdwg.mxu0
      %v1050 = vmul.f32 %v1046, 0.17677669
      %v1051 = vmul.f32 %v1048, 0.17677669
      %v1052 = vadd.f32 %v1050, %v702
      %v1053 = vadd.f32 %v1051, %v702
      %v1054 = vsel %vm975, %v1052, -inf
      %1055 = vmax.xlane.f32.xlu0 %v1054
      %v1056 = vpop.xlane.xlu0 %1055
      %v1057 = vsel %vm979, %v1053, -inf
      %1058 = vmax.xlane.f32.xlu0 %v1057
      %v1059 = vpop.xlane.xlu0 %1058
      %v1060 = vsub.f32 %v1052, %v1056
      %v1061 = vsub.f32 %v1053, %v1059
      %v1062 = vmul.f32 %v1060, 1.442695
      %v1063 = vpow.pop %v1062
      %v1064 = vmul.f32 %v1061, 1.442695
      %v1065 = vpow.pop %v1064
      %v1066 = vsel %vm975, %v1063, 0.0
      %1067 = vadd.xlane.f32.xlu0 %v1066
      %v1068 = vpop.xlane.xlu0 %1067
      %v1069 = vsel %vm979, %v1065, 0.0
      %1070 = vadd.xlane.f32.xlu0 %v1069
      %v1071 = vpop.xlane.xlu0 %1070
      %v1072 = vrcp.pop %v1068
      %v1073 = vrcp.pop %v1071
      %v1074 = vmul.f32 %v1063, %v1072
      %v1075 = vmul.f32 %v1065, %v1073
      %v1076 = vpack.c.bf16 %v1075, %v1074
      %1078 = vrot.lane.b32.xlu0 %v949, 96
      %v1079 = vpop.permute.xlu0 %1078
      %v1081 = vsel %vm975, %v1076, 0
      %v1084 = vand.u32 %v1079, %v1006
      %1086 = vmatpush.bf16.msra.mxu0 0
      %1087 = vmatpush.bf16.msra.mxu0 0
      %1088 = vmatpush.bf16.msra.mxu0 0
      %1089 = vmatpush.bf16.msra.mxu0 0
      %1090 = vmatpush.bf16.msra.mxu0 0
      %1091 = vmatpush.bf16.msra.mxu0 0
      %1092 = vmatpush.bf16.msra.mxu0 0
      %1093 = vmatpush.bf16.msra.mxu0 %v1084
      %1094 = vmatmul.bf16.gmra.mxu0 %v1081
      %v1095 = vpop.f32.mrf.mxu0
      %v1096 = vadd.f32 0.0, %v1095
      %v1097 = vpop.f32.mrf.mxu0
      %v1098 = vadd.f32 0.0, %v1097
      %1099 = vdwg.mxu0
      %1100 = vrot.lane.b32.xlu0 %v947, 64
      %v1101 = vpop.permute.xlu0 %1100
      %1102 = vrot.lane.b32.xlu0 %v948, 64
      %v1103 = vpop.permute.xlu0 %1102
      %v1105 = vsel %vm950, %v1101, 0
      %v1108 = vsel %vm950, %v1103, 0
      %1110 = vmatpush.bf16.xpose.msra.mxu0 0
      %1111 = vmatpush.bf16.xpose.msra.mxu0 0
      %1112 = vmatpush.bf16.xpose.msra.mxu0 0
      %1113 = vmatpush.bf16.xpose.msra.mxu0 0
      %1114 = vmatpush.bf16.xpose.msra.mxu0 0
      %1115 = vmatpush.bf16.xpose.msra.mxu0 0
      %1116 = vmatpush.bf16.xpose.msra.mxu0 0
      %1117 = vmatpush.bf16.xpose.msra.mxu0 %v1108
      %1118 = vmatmul.bf16.gmra.mxu0 %v1105
      %v1119 = vpop.f32.mrf.mxu0
      %v1120 = vadd.f32 0.0, %v1119
      %v1121 = vpop.f32.mrf.mxu0
      %v1122 = vadd.f32 0.0, %v1121
      %1123 = vdwg.mxu0
      %v1124 = vmul.f32 %v1120, 0.17677669
      %v1125 = vmul.f32 %v1122, 0.17677669
      %v1126 = vadd.f32 %v1124, %v702
      %v1127 = vadd.f32 %v1125, %v702
      %v1128 = vsel %vm975, %v1126, -inf
      %1129 = vmax.xlane.f32.xlu0 %v1128
      %v1130 = vpop.xlane.xlu0 %1129
      %v1131 = vsel %vm979, %v1127, -inf
      %1132 = vmax.xlane.f32.xlu0 %v1131
      %v1133 = vpop.xlane.xlu0 %1132
      %v1134 = vsub.f32 %v1126, %v1130
      %v1135 = vsub.f32 %v1127, %v1133
      %v1136 = vmul.f32 %v1134, 1.442695
      %v1137 = vpow.pop %v1136
      %v1138 = vmul.f32 %v1135, 1.442695
      %v1139 = vpow.pop %v1138
      %v1140 = vsel %vm975, %v1137, 0.0
      %1141 = vadd.xlane.f32.xlu0 %v1140
      %v1142 = vpop.xlane.xlu0 %1141
      %v1143 = vsel %vm979, %v1139, 0.0
      %1144 = vadd.xlane.f32.xlu0 %v1143
      %v1145 = vpop.xlane.xlu0 %1144
      %v1146 = vrcp.pop %v1142
      %v1147 = vrcp.pop %v1145
      %v1148 = vmul.f32 %v1137, %v1146
      %v1149 = vmul.f32 %v1139, %v1147
      %v1150 = vpack.c.bf16 %v1149, %v1148
      %1151 = vrot.lane.b32.xlu0 %v949, 64
      %v1152 = vpop.permute.xlu0 %1151
      %v1154 = vsel %vm975, %v1150, 0
      %v1157 = vand.u32 %v1152, %v1006
      %1159 = vmatpush.bf16.msra.mxu0 0
      %1160 = vmatpush.bf16.msra.mxu0 0
      %1161 = vmatpush.bf16.msra.mxu0 0
      %1162 = vmatpush.bf16.msra.mxu0 0
      %1163 = vmatpush.bf16.msra.mxu0 0
      %1164 = vmatpush.bf16.msra.mxu0 0
      %1165 = vmatpush.bf16.msra.mxu0 0
      %1166 = vmatpush.bf16.msra.mxu0 %v1157
      %1167 = vmatmul.bf16.gmra.mxu0 %v1154
      %v1168 = vpop.f32.mrf.mxu0
      %v1169 = vadd.f32 0.0, %v1168
      %v1170 = vpop.f32.mrf.mxu0
      %v1171 = vadd.f32 0.0, %v1170
      %1172 = vdwg.mxu0
      %1173 = vrot.lane.b32.xlu0 %v947, 32
      %v1174 = vpop.permute.xlu0 %1173
      %1175 = vrot.lane.b32.xlu0 %v948, 32
      %v1176 = vpop.permute.xlu0 %1175
      %v1178 = vsel %vm950, %v1174, 0
      %v1181 = vsel %vm950, %v1176, 0
      %1183 = vmatpush.bf16.xpose.msra.mxu0 0
      %1184 = vmatpush.bf16.xpose.msra.mxu0 0
      %1185 = vmatpush.bf16.xpose.msra.mxu0 0
      %1186 = vmatpush.bf16.xpose.msra.mxu0 0
      %1187 = vmatpush.bf16.xpose.msra.mxu0 0
      %1188 = vmatpush.bf16.xpose.msra.mxu0 0
      %1189 = vmatpush.bf16.xpose.msra.mxu0 0
      %1190 = vmatpush.bf16.xpose.msra.mxu0 %v1181
      %1191 = vmatmul.bf16.gmra.mxu0 %v1178
      %v1192 = vpop.f32.mrf.mxu0
      %v1193 = vadd.f32 0.0, %v1192
      %v1194 = vpop.f32.mrf.mxu0
      %v1195 = vadd.f32 0.0, %v1194
      %1196 = vdwg.mxu0
      %v1197 = vmul.f32 %v1193, 0.17677669
      %v1198 = vmul.f32 %v1195, 0.17677669
      %v1199 = vadd.f32 %v1197, %v702
      %v1200 = vadd.f32 %v1198, %v702
      %v1201 = vsel %vm975, %v1199, -inf
      %1202 = vmax.xlane.f32.xlu0 %v1201
      %v1203 = vpop.xlane.xlu0 %1202
      %v1204 = vsel %vm979, %v1200, -inf
      %1205 = vmax.xlane.f32.xlu0 %v1204
      %v1206 = vpop.xlane.xlu0 %1205
      %v1207 = vsub.f32 %v1199, %v1203
      %v1208 = vsub.f32 %v1200, %v1206
      %v1209 = vmul.f32 %v1207, 1.442695
      %v1210 = vpow.pop %v1209
      %v1211 = vmul.f32 %v1208, 1.442695
      %v1212 = vpow.pop %v1211
      %v1213 = vsel %vm975, %v1210, 0.0
      %1214 = vadd.xlane.f32.xlu0 %v1213
      %v1215 = vpop.xlane.xlu0 %1214
      %v1216 = vsel %vm979, %v1212, 0.0
      %1217 = vadd.xlane.f32.xlu0 %v1216
      %v1218 = vpop.xlane.xlu0 %1217
      %v1219 = vrcp.pop %v1215
      %v1220 = vrcp.pop %v1218
      %v1221 = vmul.f32 %v1210, %v1219
      %v1222 = vmul.f32 %v1212, %v1220
      %v1223 = vpack.c.bf16 %v1222, %v1221
      %1224 = vrot.lane.b32.xlu0 %v949, 32
      %v1225 = vpop.permute.xlu0 %1224
      %v1227 = vsel %vm975, %v1223, 0
      %v1230 = vand.u32 %v1225, %v1006
      %1232 = vmatpush.bf16.msra.mxu0 0
      %1233 = vmatpush.bf16.msra.mxu0 0
      %1234 = vmatpush.bf16.msra.mxu0 0
      %1235 = vmatpush.bf16.msra.mxu0 0
      %1236 = vmatpush.bf16.msra.mxu0 0
      %1237 = vmatpush.bf16.msra.mxu0 0
      %1238 = vmatpush.bf16.msra.mxu0 0
      %1239 = vmatpush.bf16.msra.mxu0 %v1230
      %1240 = vmatmul.bf16.gmra.mxu0 %v1227
      %v1241 = vpop.f32.mrf.mxu0
      %v1242 = vadd.f32 0.0, %v1241
      %v1243 = vpop.f32.mrf.mxu0
      %v1244 = vadd.f32 0.0, %v1243
      %1245 = vdwg.mxu0
      %1248 = vrot.lane.b32.xlu0 %v1096, 32
      %v1249 = vpop.permute.xlu0 %1248
      %1250 = vrot.lane.b32.xlu0 %v1098, 32
      %v1251 = vpop.permute.xlu0 %1250
      %1256 = vrot.lane.b32.xlu0 %v1169, 64
      %v1257 = vpop.permute.xlu0 %1256
      %1258 = vrot.lane.b32.xlu0 %v1171, 64
      %v1259 = vpop.permute.xlu0 %1258
      %1264 = vrot.lane.b32.xlu0 %v1242, 96
      %v1265 = vpop.permute.xlu0 %1264
      %1266 = vrot.lane.b32.xlu0 %v1244, 96
      %v1267 = vpop.permute.xlu0 %1266
      %v1270 = vsel %vm950, %v1020, %v1249
      %v1271 = vsel %vm950, %v1022, %v1251
      %vm1272 = vcmask 523264
      %v1273 = vsel %vm1272, %v1270, %v1257
      %v1274 = vsel %vm1272, %v1271, %v1259
      %vm1275 = vcmask 785408
      %v1276 = vsel %vm1275, %v1273, %v1265
      %v1277 = vsel %vm1275, %v1274, %v1267
      %v1278 = vld [vmem:[%s652] sm:$0xf]
      %v1279 = vld [vmem:[%s652 + $0x4] sm:$0xf]
      %v1280 = vld [vmem:[%s652 + $0x8] sm:$0xf]
      %v1281 = vld [vmem:[%s652 + $0xc] sm:$0xf]
      %v1282 = vld [vmem:[%s652 + $0x10] sm:$0xf]
      %v1283 = vld [vmem:[%s652 + $0x14] sm:$0xf]
      %v1284 = vld [vmem:[%s652 + $0x18] sm:$0xf]
      %v1285 = vld [vmem:[%s652 + $0x1c] sm:$0xf]
      %v1286 = vld [vmem:[%s652 + $0x20] sm:$0xf]
      %v1287 = vld [vmem:[%s652 + $0x24] sm:$0xf]
      %v1288 = vld [vmem:[%s652 + $0x28] sm:$0xf]
      %v1289 = vld [vmem:[%s652 + $0x2c] sm:$0xf]
      %v1290 = vld [vmem:[%s652 + $0x30] sm:$0xf]
      %v1291 = vld [vmem:[%s652 + $0x34] sm:$0xf]
      %v1292 = vld [vmem:[%s652 + $0x38] sm:$0xf]
      %v1293 = vld [vmem:[%s652 + $0x3c] sm:$0xf]
      %v1294 = vpack.c.bf16 %v1277, %v1276
      %v1295 = vld [vmem:[%s655] sm:$0x1]
      %v1297 = vperm.slane %v1295, 0
      %v1315 = vunpack.c.l.b16 %v1278
      %v1316 = vunpack.c.l.b16 %v1279
      %v1317 = vunpack.c.l.b16 %v1280
      %v1318 = vunpack.c.l.b16 %v1281
      %v1319 = vunpack.c.l.b16 %v1282
      %v1320 = vunpack.c.l.b16 %v1283
      %v1321 = vunpack.c.l.b16 %v1284
      %v1322 = vunpack.c.l.b16 %v1285
      %v1323 = vunpack.c.l.b16 %v1286
      %v1324 = vunpack.c.l.b16 %v1287
      %v1325 = vunpack.c.l.b16 %v1288
      %v1326 = vunpack.c.l.b16 %v1289
      %v1327 = vunpack.c.l.b16 %v1290
      %v1328 = vunpack.c.l.b16 %v1291
      %v1329 = vunpack.c.l.b16 %v1292
      %v1330 = vunpack.c.l.b16 %v1293
      %v1331 = vpack.c.b16 %v1316, %v1315
      %v1332 = vpack.c.b16 %v1318, %v1317
      %v1333 = vpack.c.b16 %v1320, %v1319
      %v1334 = vpack.c.b16 %v1322, %v1321
      %v1335 = vpack.c.b16 %v1324, %v1323
      %v1336 = vpack.c.b16 %v1326, %v1325
      %v1337 = vpack.c.b16 %v1328, %v1327
      %v1338 = vpack.c.b16 %v1330, %v1329
      %1347 = vmatpush.bf16.xpose.msra.mxu0 %v1338
      %1348 = vmatpush.bf16.xpose.msra.mxu0 %v1337
      %1349 = vmatpush.bf16.xpose.msra.mxu0 %v1336
      %1350 = vmatpush.bf16.xpose.msra.mxu0 %v1335
      %1351 = vmatpush.bf16.xpose.msra.mxu0 %v1334
      %1352 = vmatpush.bf16.xpose.msra.mxu0 %v1333
      %1353 = vmatpush.bf16.xpose.msra.mxu0 %v1332
      %1354 = vmatpush.bf16.xpose.msra.mxu0 %v1331
      %1355 = vmatmul.bf16.gmra.mxu0 %v1294
      %v1356 = vpop.f32.mrf.mxu0
      %v1357 = vadd.f32 %v1297, %v1356
      %v1358 = vpop.f32.mrf.mxu0
      %v1359 = vadd.f32 %v1297, %v1358
      %1360 = vdwg.mxu0
      %v1361 = vadd.f32 %v698, %v1357
      %v1362 = vadd.f32 %v699, %v1359
      %v1363 = vld [vmem:[%s674] sm:$0x1]
      %v1364 = vld [vmem:[%s677] sm:$0x1]
      %1365 = vadd.xlane.f32.xlu0 %v1361
      %v1366 = vpop.xlane.xlu0 %1365
      %vm1367 = vcmask 1040384
      %v1368 = vsel %vm1367, %v1362, 0.0
      %1369 = vadd.xlane.f32.xlu0 %v1368
      %v1370 = vpop.xlane.xlu0 %1369
      %v1371 = vrcp.pop 128.0
      %v1372 = vmul.f32 128.0, %v1371
      %v1373 = vsub.f32 1.0, %v1372
      %v1374 = vmul.f32 %v1371, %v1373
      %v1375 = vadd.f32 %v1371, %v1374
      %vm1376 = vweird.f32 %v1371
      %v1377 = vsel %vm1376, %v1371, %v1375
      %v1378 = vmul.f32 %v1366, %v1377
      %v1379 = vmul.f32 %v1370, %v1377
      %v1380 = vsub.f32 %v1361, %v1378
      %v1381 = vsub.f32 %v1362, %v1379
      %v1382 = vmul.f32 %v1380, %v1380
      %v1383 = vmul.f32 %v1381, %v1381
      %1384 = vadd.xlane.f32.xlu0 %v1382
      %v1385 = vpop.xlane.xlu0 %1384
      %v1386 = vsel %vm1367, %v1383, 0.0
      %1387 = vadd.xlane.f32.xlu0 %v1386
      %v1388 = vpop.xlane.xlu0 %1387
      %v1389 = vmul.f32 %v1385, %v1377
      %v1390 = vmul.f32 %v1388, %v1377
      %v1391 = vadd.f32 %v1389, 1e-05
      %v1392 = vadd.f32 %v1390, 1e-05
      %v1393 = vrsqrt.pop %v1391
      %v1394 = vmul.f32 %v1393, %v1391
      %v1395 = vmul.f32 %v1394, %v1393
      %v1396 = vmul.f32 0.5, %v1395
      %v1397 = vsub.f32 1.5, %v1396
      %v1398 = vmul.f32 %v1393, %v1397
      %vm1399 = vweird.f32 %v1391
      %vm1400 = vweird.f32 %v1393
      %vm1401 = vmor %vm1399, %vm1400
      %v1402 = vsel %vm1401, %v1393, %v1398
      %v1403 = vrsqrt.pop %v1392
      %v1404 = vmul.f32 %v1403, %v1392
      %v1405 = vmul.f32 %v1404, %v1403
      %v1406 = vmul.f32 0.5, %v1405
      %v1407 = vsub.f32 1.5, %v1406
      %v1408 = vmul.f32 %v1403, %v1407
      %vm1409 = vweird.f32 %v1392
      %vm1410 = vweird.f32 %v1403
      %vm1411 = vmor %vm1409, %vm1410
      %v1412 = vsel %vm1411, %v1403, %v1408
      %v1413 = vmul.f32 %v1380, %v1402
      %v1414 = vmul.f32 %v1381, %v1412
      %v1416 = vperm.slane %v1363, 0
      %v1418 = vmul.f32 %v1413, %v1416
      %v1419 = vmul.f32 %v1414, %v1416
      %v1421 = vperm.slane %v1364, 0
      %v1423 = vadd.f32 %v1418, %v1421
      %v1424 = vadd.f32 %v1419, %v1421
      %v1425 = vld [vmem:[%s660] sm:$0xf]
      %v1426 = vld [vmem:[%s660 + $0x4] sm:$0xf]
      %v1427 = vld [vmem:[%s660 + $0x8] sm:$0xf]
      %v1428 = vld [vmem:[%s660 + $0xc] sm:$0xf]
      %v1429 = vld [vmem:[%s660 + $0x10] sm:$0xf]
      %v1430 = vld [vmem:[%s660 + $0x14] sm:$0xf]
      %v1431 = vld [vmem:[%s660 + $0x18] sm:$0xf]
      %v1432 = vld [vmem:[%s660 + $0x1c] sm:$0xf]
      %v1433 = vld [vmem:[%s660 + $0x20] sm:$0xf]
      %v1434 = vld [vmem:[%s660 + $0x24] sm:$0xf]
      %v1435 = vld [vmem:[%s660 + $0x28] sm:$0xf]
      %v1436 = vld [vmem:[%s660 + $0x2c] sm:$0xf]
      %v1437 = vld [vmem:[%s660 + $0x30] sm:$0xf]
      %v1438 = vld [vmem:[%s660 + $0x34] sm:$0xf]
      %v1439 = vld [vmem:[%s660 + $0x38] sm:$0xf]
      %v1440 = vld [vmem:[%s660 + $0x3c] sm:$0xf]
      %v1441 = vpack.c.bf16 %v1424, %v1423
      %v1442 = vld [vmem:[%s663] sm:$0x1]
      %v1444 = vperm.slane %v1442, 0
      %v1462 = vunpack.c.l.b16 %v1425
      %v1463 = vunpack.c.l.b16 %v1426
      %v1464 = vunpack.c.l.b16 %v1427
      %v1465 = vunpack.c.l.b16 %v1428
      %v1466 = vunpack.c.l.b16 %v1429
      %v1467 = vunpack.c.l.b16 %v1430
      %v1468 = vunpack.c.l.b16 %v1431
      %v1469 = vunpack.c.l.b16 %v1432
      %v1470 = vunpack.c.l.b16 %v1433
      %v1471 = vunpack.c.l.b16 %v1434
      %v1472 = vunpack.c.l.b16 %v1435
      %v1473 = vunpack.c.l.b16 %v1436
      %v1474 = vunpack.c.l.b16 %v1437
      %v1475 = vunpack.c.l.b16 %v1438
      %v1476 = vunpack.c.l.b16 %v1439
      %v1477 = vunpack.c.l.b16 %v1440
      %v1478 = vpack.c.b16 %v1463, %v1462
      %v1479 = vpack.c.b16 %v1465, %v1464
      %v1480 = vpack.c.b16 %v1467, %v1466
      %v1481 = vpack.c.b16 %v1469, %v1468
      %v1482 = vpack.c.b16 %v1471, %v1470
      %v1483 = vpack.c.b16 %v1473, %v1472
      %v1484 = vpack.c.b16 %v1475, %v1474
      %v1485 = vpack.c.b16 %v1477, %v1476
      %1494 = vmatpush.bf16.xpose.msra.mxu0 %v1485
      %1495 = vmatpush.bf16.xpose.msra.mxu0 %v1484
      %1496 = vmatpush.bf16.xpose.msra.mxu0 %v1483
      %1497 = vmatpush.bf16.xpose.msra.mxu0 %v1482
      %1498 = vmatpush.bf16.xpose.msra.mxu0 %v1481
      %1499 = vmatpush.bf16.xpose.msra.mxu0 %v1480
      %1500 = vmatpush.bf16.xpose.msra.mxu0 %v1479
      %1501 = vmatpush.bf16.xpose.msra.mxu0 %v1478
      %1502 = vmatmul.bf16.gmra.mxu0 %v1441
      %v1503 = vpop.f32.mrf.mxu0
      %v1504 = vadd.f32 %v1444, %v1503
      %v1505 = vpop.f32.mrf.mxu0
      %v1506 = vadd.f32 %v1444, %v1505
      %1507 = vdwg.mxu0
      %v1508 = vmax.f32 %v1504, 0.0
      %v1509 = vmax.f32 %v1506, 0.0
      %v1510 = vld [vmem:[%s668] sm:$0xf]
      %v1511 = vld [vmem:[%s668 + $0x4] sm:$0xf]
      %v1512 = vld [vmem:[%s668 + $0x8] sm:$0xf]
      %v1513 = vld [vmem:[%s668 + $0xc] sm:$0xf]
      %v1514 = vld [vmem:[%s668 + $0x10] sm:$0xf]
      %v1515 = vld [vmem:[%s668 + $0x14] sm:$0xf]
      %v1516 = vld [vmem:[%s668 + $0x18] sm:$0xf]
      %v1517 = vld [vmem:[%s668 + $0x1c] sm:$0xf]
      %v1518 = vld [vmem:[%s668 + $0x20] sm:$0xf]
      %v1519 = vld [vmem:[%s668 + $0x24] sm:$0xf]
      %v1520 = vld [vmem:[%s668 + $0x28] sm:$0xf]
      %v1521 = vld [vmem:[%s668 + $0x2c] sm:$0xf]
      %v1522 = vld [vmem:[%s668 + $0x30] sm:$0xf]
      %v1523 = vld [vmem:[%s668 + $0x34] sm:$0xf]
      %v1524 = vld [vmem:[%s668 + $0x38] sm:$0xf]
      %v1525 = vld [vmem:[%s668 + $0x3c] sm:$0xf]
      %v1526 = vpack.c.bf16 %v1509, %v1508
      %v1527 = vld [vmem:[%s671] sm:$0x1]
      %v1529 = vperm.slane %v1527, 0
      %v1547 = vunpack.c.l.b16 %v1510
      %v1548 = vunpack.c.l.b16 %v1511
      %v1549 = vunpack.c.l.b16 %v1512
      %v1550 = vunpack.c.l.b16 %v1513
      %v1551 = vunpack.c.l.b16 %v1514
      %v1552 = vunpack.c.l.b16 %v1515
      %v1553 = vunpack.c.l.b16 %v1516
      %v1554 = vunpack.c.l.b16 %v1517
      %v1555 = vunpack.c.l.b16 %v1518
      %v1556 = vunpack.c.l.b16 %v1519
      %v1557 = vunpack.c.l.b16 %v1520
      %v1558 = vunpack.c.l.b16 %v1521
      %v1559 = vunpack.c.l.b16 %v1522
      %v1560 = vunpack.c.l.b16 %v1523
      %v1561 = vunpack.c.l.b16 %v1524
      %v1562 = vunpack.c.l.b16 %v1525
      %v1563 = vpack.c.b16 %v1548, %v1547
      %v1564 = vpack.c.b16 %v1550, %v1549
      %v1565 = vpack.c.b16 %v1552, %v1551
      %v1566 = vpack.c.b16 %v1554, %v1553
      %v1567 = vpack.c.b16 %v1556, %v1555
      %v1568 = vpack.c.b16 %v1558, %v1557
      %v1569 = vpack.c.b16 %v1560, %v1559
      %v1570 = vpack.c.b16 %v1562, %v1561
      %1579 = vmatpush.bf16.xpose.msra.mxu0 %v1570
      %1580 = vmatpush.bf16.xpose.msra.mxu0 %v1569
      %1581 = vmatpush.bf16.xpose.msra.mxu0 %v1568
      %1582 = vmatpush.bf16.xpose.msra.mxu0 %v1567
      %1583 = vmatpush.bf16.xpose.msra.mxu0 %v1566
      %1584 = vmatpush.bf16.xpose.msra.mxu0 %v1565
      %1585 = vmatpush.bf16.xpose.msra.mxu0 %v1564
      %1586 = vmatpush.bf16.xpose.msra.mxu0 %v1563
      %1587 = vmatmul.bf16.gmra.mxu0 %v1526
      %v1588 = vpop.f32.mrf.mxu0
      %v1589 = vadd.f32 %v1529, %v1588
      %v1590 = vpop.f32.mrf.mxu0
      %v1591 = vadd.f32 %v1529, %v1590
      %1592 = vdwg.mxu0
      %v1593 = vadd.f32 %v1423, %v1589
      %v1594 = vadd.f32 %v1424, %v1591
      %v1595 = vld [vmem:[%s680] sm:$0x1]
      %v1596 = vld [vmem:[%s683] sm:$0x1]
      %1597 = vadd.xlane.f32.xlu0 %v1593
      %v1598 = vpop.xlane.xlu0 %1597
      %v1599 = vsel %vm1367, %v1594, 0.0
      %1600 = vadd.xlane.f32.xlu0 %v1599
      %v1601 = vpop.xlane.xlu0 %1600
      %v1602 = vmul.f32 %v1598, %v1377
      %v1603 = vmul.f32 %v1601, %v1377
      %v1604 = vsub.f32 %v1593, %v1602
      %v1605 = vsub.f32 %v1594, %v1603
      %v1606 = vmul.f32 %v1604, %v1604
      %v1607 = vmul.f32 %v1605, %v1605
      %1608 = vadd.xlane.f32.xlu0 %v1606
      %v1609 = vpop.xlane.xlu0 %1608
      %v1610 = vsel %vm1367, %v1607, 0.0
      %1611 = vadd.xlane.f32.xlu0 %v1610
      %v1612 = vpop.xlane.xlu0 %1611
      %v1613 = vmul.f32 %v1609, %v1377
      %v1614 = vmul.f32 %v1612, %v1377
      %v1615 = vadd.f32 %v1613, 1e-05
      %v1616 = vadd.f32 %v1614, 1e-05
      %v1617 = vrsqrt.pop %v1615
      %v1618 = vmul.f32 %v1617, %v1615
      %v1619 = vmul.f32 %v1618, %v1617
      %v1620 = vmul.f32 0.5, %v1619
      %v1621 = vsub.f32 1.5, %v1620
      %v1622 = vmul.f32 %v1617, %v1621
      %vm1623 = vweird.f32 %v1615
      %vm1624 = vweird.f32 %v1617
      %vm1625 = vmor %vm1623, %vm1624
      %v1626 = vsel %vm1625, %v1617, %v1622
      %v1627 = vrsqrt.pop %v1616
      %v1628 = vmul.f32 %v1627, %v1616
      %v1629 = vmul.f32 %v1628, %v1627
      %v1630 = vmul.f32 0.5, %v1629
      %v1631 = vsub.f32 1.5, %v1630
      %v1632 = vmul.f32 %v1627, %v1631
      %vm1633 = vweird.f32 %v1616
      %vm1634 = vweird.f32 %v1627
      %vm1635 = vmor %vm1633, %vm1634
      %v1636 = vsel %vm1635, %v1627, %v1632
      %v1637 = vmul.f32 %v1604, %v1626
      %v1638 = vmul.f32 %v1605, %v1636
      %v1640 = vperm.slane %v1595, 0
      %v1642 = vmul.f32 %v1637, %v1640
      %v1643 = vmul.f32 %v1638, %v1640
      %v1645 = vperm.slane %v1596, 0
      %v1647 = vadd.f32 %v1642, %v1645
      %v1648 = vadd.f32 %v1643, %v1645
      %1649 = vst [vmem:[#allocation2] sm:$0xff] %v1647
      %1650 = vst [vmem:[#allocation2 + $0x8] sm:$0x1] %v1648
      %p1651 = scmp.eq.s32.totalorder %s30, 1
      // Predicated region
      $region81: #{forward.3} parent=75 // pred_check
        %p1652 = pneg %p1651
      $region82: #{forward.3} parent=75 // pred_check_branch
        %1654 = sbr.rel (%p1652) target = $region84
      $region83: #{forward.3} parent=75 // pred_region
        %1655 = vst [vmem:[%s688] sm:$0xff] %v1647
        %1656 = vst [vmem:[%s688 + $0x8] sm:$0x1] %v1648
      $region84: #{forward.3} parent=75 // pred_fallthru
        _
      %p1657 = scmp.lt.s32.totalorder %s29, 1
      %s1658 = scalar_select %p1657, %s29, 1
      %s1659 = smul.addr %s1658, 2
      %s1660 = smul.addr %s1659, 8
      %s1661 = scalar_lea.vmem %s14, %s1660
      // Predicated region
      $region85: #{forward.3} parent=75 // pred_check
        %p1662 = pneg %p419
      $region86: #{forward.3} parent=75 // pred_check_branch
        %1664 = sbr.rel (%p1662) target = $region88
      $region87: #{forward.3} parent=75 // pred_region
        _
      $region88: #{forward.3} parent=75 // pred_fallthru
        _
    $region76: #{forward.3} parent=5 // pred_fallthru
      _
    %p1665 = scmp.le.s32.totalorder 2, %s20
    // Predicated region
    $region89: #{forward.3} parent=5 // pred_check
      %p1666 = pneg %p1665
    $region90: #{forward.3} parent=5 // pred_check_branch
      %1668 = sbr.rel (%p1666) target = $region92
    $region91: #{forward.3} parent=5 // pred_region
      %s1669 = ssub.s32 %s20, 2
      // Predicated region
      $region93: #{forward.3} parent=91 // pred_check
        %p1670 = pneg %p425
      $region94: #{forward.3} parent=91 // pred_check_branch
        %1672 = sbr.rel (%p1670) target = $region96
      $region95: #{forward.3} parent=91 // pred_region
        %p1673 = scmp.lt.s32.totalorder %s31, 1
        %s1674 = scalar_select %p1673, %s31, 1
        %s1675 = smul.addr %s1674, 2
        %s1676 = smul.addr %s1675, 8
        %s1677 = scalar_lea.vmem %s14, %s1676
      $region96: #{forward.3} parent=91 // pred_fallthru
        _
    $region92: #{forward.3} parent=5 // pred_fallthru
      _
  $region6: #{forward.3} parent=0 // loop_footer
    %s24 = sadd.s32 1, %s20
  $region7: #{forward.3} parent=0 // loop_footer_branch
    %19 = sbr.rel target = $region3
  $region8: #{forward.3} parent=0 // loop_exit
    _

</llo_original>
